<compile_context>
chip_gen: v7x
topology: tpu7x:2x2x1
jax: 0.10.0
libtpu: 0.0.40
codegen_flags: <defaults>
</compile_context>

<pallas_src>
import jax
import jax.numpy as jnp
from jax.experimental import pallas as pl
from jax.experimental.pallas import tpu as pltpu

HIDDEN_SIZE = 64
NUM_LAYERS = 2          # fixed to 2 layers, as in the PyTorch module
OP = 128                # fc output padded to one full vreg of lanes


def _lstm_fc_kernel(x_ref,
                    wih0_ref, whh0_ref, b0_ref,
                    w1_ref, b1_ref,
                    wfc_ref, bfc_ref,
                    out_ref):
    """Whole forward pass in one grid-less kernel (everything resident in VMEM).

    Weight layout (prepared once by make_lstm_forward; gate order permuted from
    PyTorch's [i|f|g|o] to [i|f|o|g] so sigmoid/tanh each act on one contiguous
    slab; NO per-gate lane padding — gates occupy 4H = 256 lanes):
      x:    (T,  I)      bf16
      wih0: (I,  4H)     bf16   layer-0 input weights
      whh0: (H,  4H)     bf16   layer-0 recurrent weights
      b0:   (1,  4H)     f32    b_ih_l0 + b_hh_l0
      w1:   (2H, 4H)     bf16   layer-1 [W_ih; W_hh] stacked (input rows first)
      b1:   (1,  4H)     f32    b_ih_l1 + b_hh_l1
      wfc:  (H,  OP)     bf16   fc weight (output lanes zero-padded to 128)
      bfc:  (1,  OP)     f32    fc bias   (zero-padded)
    """
    T = x_ref.shape[0]
    H = HIDDEN_SIZE

    # Hoisted, non-recurrent layer-0 input projection: one (T, 4H) matmul.
    gx0 = (jnp.dot(x_ref[...], wih0_ref[...],
                   preferred_element_type=jnp.float32)
           + b0_ref[...])                                        # (T, 4H) f32

    b1 = b1_ref[...]                                             # (1, 4H) f32

    def act(gates):
        # gate layout [i | f | o | g]: one contiguous sigmoid slab + one tanh
        # slab; the 64-lane sub-slices are cheap lane selects (XLU slot slack).
        sig = jax.nn.sigmoid(gates[:, :3 * H])                   # (1, 3H)
        g_g = jnp.tanh(gates[:, 3 * H:])                         # (1, H)
        return sig[:, 0:H], sig[:, H:2 * H], sig[:, 2 * H:3 * H], g_g

    h1 = jnp.zeros((1, H), jnp.float32)
    c1 = jnp.zeros((1, H), jnp.float32)
    h2 = jnp.zeros((1, H), jnp.float32)
    c2 = jnp.zeros((1, H), jnp.float32)

    # Static unroll over the small, static sequence length: state lives in vregs
    # and the scheduler can overlap layer-0 of step t+1 with layer-1 of step t.
    # For long sequences switch this to lax.fori_loop(..., unroll=4/8) to bound
    # compile time and live vreg count.
    for t in range(T):
        # ---- layer 0: only the recurrent matmul (input part is in gx0) ----
        g0 = gx0[t:t + 1, :] + jnp.dot(h1.astype(jnp.bfloat16), whh0_ref[...],
                                       preferred_element_type=jnp.float32)
        i0, f0, o0, gg0 = act(g0)
        c1 = f0 * c1 + i0 * gg0
        h1 = o0 * jnp.tanh(c1)

        # ---- layer 1: fused [input, hidden] x [W_ih; W_hh] matmul ----
        hh = jnp.concatenate([h1, h2], axis=1).astype(jnp.bfloat16)   # (1, 2H)
        g1 = jnp.dot(hh, w1_ref[...], preferred_element_type=jnp.float32) + b1
        i1, f1, o1, gg1 = act(g1)
        c2 = f1 * c2 + i1 * gg1
        h2 = o1 * jnp.tanh(c2)

    # fc(out[:, -1, :]) -> Linear on the last hidden state of the top layer.
    # Output kept at 128 lanes -> unmasked full-lane store.
    out_ref[...] = (jnp.dot(h2.astype(jnp.bfloat16), wfc_ref[...],
                            preferred_element_type=jnp.float32)
                    + bfc_ref[...])


def _prep_gate_weight(w):
    """PyTorch (4H, in_dim) gate weight -> (in_dim, 4H) bf16, gates i,f,g,o -> i,f,o,g."""
    H = HIDDEN_SIZE
    wt = jnp.asarray(w, jnp.float32).T                           # (in_dim, 4H)
    out = jnp.concatenate(
        [wt[:, 0:H], wt[:, H:2 * H], wt[:, 3 * H:4 * H], wt[:, 2 * H:3 * H]],
        axis=1)
    return out.astype(jnp.bfloat16)


def _prep_gate_bias(b_ih, b_hh):
    H = HIDDEN_SIZE
    b = jnp.asarray(b_ih, jnp.float32) + jnp.asarray(b_hh, jnp.float32)
    return jnp.concatenate(
        [b[0:H], b[H:2 * H], b[3 * H:4 * H], b[2 * H:3 * H]]).reshape(1, 4 * H)


def prepare_params(params):
    """One-time weight preparation (kept OUT of the per-call path)."""
    H = HIDDEN_SIZE
    O = params["w_fc"].shape[0]

    wih0 = _prep_gate_weight(params["w_ih_l0"])                        # (I, 4H)
    whh0 = _prep_gate_weight(params["w_hh_l0"])                        # (H, 4H)
    b0 = _prep_gate_bias(params["b_ih_l0"], params["b_hh_l0"])         # (1, 4H)
    wih1 = _prep_gate_weight(params["w_ih_l1"])                        # (H, 4H)
    whh1 = _prep_gate_weight(params["w_hh_l1"])                        # (H, 4H)
    w1 = jnp.concatenate([wih1, whh1], axis=0)                         # (2H, 4H)
    b1 = _prep_gate_bias(params["b_ih_l1"], params["b_hh_l1"])         # (1, 4H)
    wfc = jnp.pad(jnp.asarray(params["w_fc"], jnp.float32).T,
                  ((0, 0), (0, OP - O))).astype(jnp.bfloat16)          # (H, OP)
    bfc = jnp.pad(jnp.asarray(params["b_fc"], jnp.float32),
                  (0, OP - O)).reshape(1, OP)                          # (1, OP)
    return (wih0, whh0, b0, w1, b1, wfc, bfc), O


def make_lstm_forward(params):
    """Build the forward function. Weight prep happens exactly once, here."""
    prepped, out_size = prepare_params(params)

    @jax.jit
    def forward(x):
        # x: (seq_len, input_size) -> (output_size,)
        x_bf = jnp.asarray(x, jnp.float32).astype(jnp.bfloat16)
        args = (x_bf,) + prepped
        out = pl.pallas_call(
            _lstm_fc_kernel,
            out_shape=jax.ShapeDtypeStruct((1, OP), jnp.float32),
            in_specs=[pl.BlockSpec(memory_space=pltpu.MemorySpace.VMEM)
                      for _ in args],
            out_specs=pl.BlockSpec(memory_space=pltpu.MemorySpace.VMEM),
        )(*args)
        return out[0, :out_size]

    return forward


def lstm_model_forward(x, params):
    """Convenience one-shot wrapper (prep + call). Prefer make_lstm_forward."""
    return make_lstm_forward(params)(x)


def _make_params(key, input_size, output_size):
    """Deterministic synthetic parameters with PyTorch LSTM/Linear shapes."""
    H = HIDDEN_SIZE
    k = 1.0 / jnp.sqrt(jnp.float32(H))
    names_shapes = [
        ("w_ih_l0", (4 * H, input_size)),
        ("w_hh_l0", (4 * H, H)),
        ("b_ih_l0", (4 * H,)),
        ("b_hh_l0", (4 * H,)),
        ("w_ih_l1", (4 * H, H)),
        ("w_hh_l1", (4 * H, H)),
        ("b_ih_l1", (4 * H,)),
        ("b_hh_l1", (4 * H,)),
        ("w_fc", (output_size, H)),
        ("b_fc", (output_size,)),
    ]
    params = {}
    for name, shape in names_shapes:
        key, sub = jax.random.split(key)
        params[name] = jax.random.uniform(sub, shape, jnp.float32, -k, k)
    return params


def _reference_forward(x, params):
    """Pure-JAX f32 reference of the PyTorch forward (for a correctness check)."""
    H = HIDDEN_SIZE

    def cell(x_t, h, c, w_ih, w_hh, b_ih, b_hh):
        g = x_t @ w_ih.T + b_ih + h @ w_hh.T + b_hh
        i, f, gg, o = jnp.split(g, 4, axis=-1)
        c_new = jax.nn.sigmoid(f) * c + jax.nn.sigmoid(i) * jnp.tanh(gg)
        h_new = jax.nn.sigmoid(o) * jnp.tanh(c_new)
        return h_new, c_new

    h1 = c1 = h2 = c2 = jnp.zeros((1, H), jnp.float32)
    for t in range(x.shape[0]):
        x_t = x[t:t + 1]
        h1, c1 = cell(x_t, h1, c1, params["w_ih_l0"], params["w_hh_l0"],
                      params["b_ih_l0"], params["b_hh_l0"])
        h2, c2 = cell(h1, h2, c2, params["w_ih_l1"], params["w_hh_l1"],
                      params["b_ih_l1"], params["b_hh_l1"])
    out = h2 @ params["w_fc"].T + params["b_fc"]
    return out[0]


if __name__ == "__main__":
    SEQ_LEN = 8
    INPUT_SIZE = 8
    OUTPUT_SIZE = 4

    key = jax.random.PRNGKey(0)
    key, kx = jax.random.split(key)
    x = jax.random.normal(kx, (SEQ_LEN, INPUT_SIZE), jnp.float32)
    params = _make_params(key, INPUT_SIZE, OUTPUT_SIZE)

    forward = make_lstm_forward(params)      # weight prep happens once, here
    y = forward(x)
    y = jax.block_until_ready(y)

    y_ref = _reference_forward(x, params)
    assert y.shape == (OUTPUT_SIZE,)
    # bf16 matmul operands (x, recurrent state) -> relaxed tolerance vs. the
    # f32 reference. Drift compounds for much longer sequences; switch the
    # recurrent matmuls to f32 there if it matters.
    assert jnp.allclose(y, y_ref, atol=5e-2, rtol=5e-2), (y, y_ref)

    print("KERNEL_OK")
</pallas_src>

<mosaic_0001>
module attributes {stable_mosaic.version = 11 : i64} {
  func.func @_lstm_fc_kernel(%arg0: memref<8x8xbf16, #tpu.memory_space<vmem>>, %arg1: memref<8x256xbf16, #tpu.memory_space<vmem>>, %arg2: memref<64x256xbf16, #tpu.memory_space<vmem>>, %arg3: memref<1x256xf32, #tpu.memory_space<vmem>>, %arg4: memref<128x256xbf16, #tpu.memory_space<vmem>>, %arg5: memref<1x256xf32, #tpu.memory_space<vmem>>, %arg6: memref<64x128xbf16, #tpu.memory_space<vmem>>, %arg7: memref<1x128xf32, #tpu.memory_space<vmem>>, %arg8: memref<1x128xf32, #tpu.memory_space<vmem>>) attributes {dimension_semantics = [], scalar_prefetch = 0 : i64, scratch_operands = 0 : i64, tpu.core_type = #tpu.core_type<tc>} {
    %c0 = arith.constant 0 : index
    %c0_0 = arith.constant 0 : index
    %0 = vector.load %arg0[%c0, %c0_0] : memref<8x8xbf16, #tpu.memory_space<vmem>>, vector<8x8xbf16>
    %c0_1 = arith.constant 0 : index
    %c0_2 = arith.constant 0 : index
    %1 = vector.load %arg1[%c0_1, %c0_2] : memref<8x256xbf16, #tpu.memory_space<vmem>>, vector<8x256xbf16>
    %cst = arith.constant dense<0.000000e+00> : vector<8x256xf32>
    %2 = tpu.matmul %0, %1, %cst {dimension_numbers = #tpu.dot_dimension_numbers<[1], [0], [0], [1], [0, 0, 1, 1], [], []>} : vector<8x8xbf16>, vector<8x256xbf16>, vector<8x256xf32> -> vector<8x256xf32>
    %c0_3 = arith.constant 0 : index
    %c0_4 = arith.constant 0 : index
    %3 = vector.load %arg3[%c0_3, %c0_4] : memref<1x256xf32, #tpu.memory_space<vmem>>, vector<1x256xf32>
    %4 = vector.broadcast %3 : vector<1x256xf32> to vector<8x256xf32>
    %5 = arith.addf %2, %4 : vector<8x256xf32>
    %c0_5 = arith.constant 0 : index
    %c0_6 = arith.constant 0 : index
    %6 = vector.load %arg5[%c0_5, %c0_6] : memref<1x256xf32, #tpu.memory_space<vmem>>, vector<1x256xf32>
    %cst_7 = arith.constant 0.000000e+00 : f32
    %7 = vector.broadcast %cst_7 : f32 to vector<1x64xf32>
    %cst_8 = arith.constant 0.000000e+00 : f32
    %8 = vector.broadcast %cst_8 : f32 to vector<1x64xf32>
    %cst_9 = arith.constant 0.000000e+00 : f32
    %9 = vector.broadcast %cst_9 : f32 to vector<1x64xf32>
    %cst_10 = arith.constant 0.000000e+00 : f32
    %10 = vector.broadcast %cst_10 : f32 to vector<1x64xf32>
    %11 = vector.extract_strided_slice %5 {offsets = [0, 0], sizes = [1, 256], strides = [1, 1]} : vector<8x256xf32> to vector<1x256xf32>
    %12 = arith.truncf %7 : vector<1x64xf32> to vector<1x64xbf16>
    %c0_11 = arith.constant 0 : index
    %c0_12 = arith.constant 0 : index
    %13 = vector.load %arg2[%c0_11, %c0_12] : memref<64x256xbf16, #tpu.memory_space<vmem>>, vector<64x256xbf16>
    %cst_13 = arith.constant dense<0.000000e+00> : vector<1x256xf32>
    %14 = tpu.matmul %12, %13, %cst_13 {dimension_numbers = #tpu.dot_dimension_numbers<[1], [0], [0], [1], [0, 0, 1, 1], [], []>} : vector<1x64xbf16>, vector<64x256xbf16>, vector<1x256xf32> -> vector<1x256xf32>
    %15 = arith.addf %11, %14 : vector<1x256xf32>
    %16 = vector.extract_strided_slice %15 {offsets = [0, 0], sizes = [1, 192], strides = [1, 1]} : vector<1x256xf32> to vector<1x192xf32>
    %17 = arith.negf %16 : vector<1x192xf32>
    %18 = math.exp %17 : vector<1x192xf32>
    %cst_14 = arith.constant 1.000000e+00 : f32
    %19 = vector.broadcast %cst_14 : f32 to vector<1x192xf32>
    %20 = arith.addf %19, %18 : vector<1x192xf32>
    %21 = arith.divf %19, %20 : vector<1x192xf32>
    %22 = vector.extract_strided_slice %15 {offsets = [0, 192], sizes = [1, 64], strides = [1, 1]} : vector<1x256xf32> to vector<1x64xf32>
    %23 = math.tanh %22 : vector<1x64xf32>
    %24 = vector.extract_strided_slice %21 {offsets = [0, 0], sizes = [1, 64], strides = [1, 1]} : vector<1x192xf32> to vector<1x64xf32>
    %25 = vector.extract_strided_slice %21 {offsets = [0, 64], sizes = [1, 64], strides = [1, 1]} : vector<1x192xf32> to vector<1x64xf32>
    %26 = vector.extract_strided_slice %21 {offsets = [0, 128], sizes = [1, 64], strides = [1, 1]} : vector<1x192xf32> to vector<1x64xf32>
    %27 = arith.mulf %25, %8 : vector<1x64xf32>
    %28 = arith.mulf %24, %23 : vector<1x64xf32>
    %29 = arith.addf %27, %28 : vector<1x64xf32>
    %30 = math.tanh %29 : vector<1x64xf32>
    %31 = arith.mulf %26, %30 : vector<1x64xf32>
    %32 = tpu.concatenate %31, %9 in 1 : vector<1x64xf32>, vector<1x64xf32> -> vector<1x128xf32>
    %33 = arith.truncf %32 : vector<1x128xf32> to vector<1x128xbf16>
    %c0_15 = arith.constant 0 : index
    %c0_16 = arith.constant 0 : index
    %34 = vector.load %arg4[%c0_15, %c0_16] : memref<128x256xbf16, #tpu.memory_space<vmem>>, vector<128x256xbf16>
    %cst_17 = arith.constant dense<0.000000e+00> : vector<1x256xf32>
    %35 = tpu.matmul %33, %34, %cst_17 {dimension_numbers = #tpu.dot_dimension_numbers<[1], [0], [0], [1], [0, 0, 1, 1], [], []>} : vector<1x128xbf16>, vector<128x256xbf16>, vector<1x256xf32> -> vector<1x256xf32>
    %36 = arith.addf %35, %6 : vector<1x256xf32>
    %37 = vector.extract_strided_slice %36 {offsets = [0, 0], sizes = [1, 192], strides = [1, 1]} : vector<1x256xf32> to vector<1x192xf32>
    %38 = arith.negf %37 : vector<1x192xf32>
    %39 = math.exp %38 : vector<1x192xf32>
    %cst_18 = arith.constant 1.000000e+00 : f32
    %40 = vector.broadcast %cst_18 : f32 to vector<1x192xf32>
    %41 = arith.addf %40, %39 : vector<1x192xf32>
    %42 = arith.divf %40, %41 : vector<1x192xf32>
    %43 = vector.extract_strided_slice %36 {offsets = [0, 192], sizes = [1, 64], strides = [1, 1]} : vector<1x256xf32> to vector<1x64xf32>
    %44 = math.tanh %43 : vector<1x64xf32>
    %45 = vector.extract_strided_slice %42 {offsets = [0, 0], sizes = [1, 64], strides = [1, 1]} : vector<1x192xf32> to vector<1x64xf32>
    %46 = vector.extract_strided_slice %42 {offsets = [0, 64], sizes = [1, 64], strides = [1, 1]} : vector<1x192xf32> to vector<1x64xf32>
    %47 = vector.extract_strided_slice %42 {offsets = [0, 128], sizes = [1, 64], strides = [1, 1]} : vector<1x192xf32> to vector<1x64xf32>
    %48 = arith.mulf %46, %10 : vector<1x64xf32>
    %49 = arith.mulf %45, %44 : vector<1x64xf32>
    %50 = arith.addf %48, %49 : vector<1x64xf32>
    %51 = math.tanh %50 : vector<1x64xf32>
    %52 = arith.mulf %47, %51 : vector<1x64xf32>
    %53 = vector.extract_strided_slice %5 {offsets = [1, 0], sizes = [1, 256], strides = [1, 1]} : vector<8x256xf32> to vector<1x256xf32>
    %54 = arith.truncf %31 : vector<1x64xf32> to vector<1x64xbf16>
    %c0_19 = arith.constant 0 : index
    %c0_20 = arith.constant 0 : index
    %55 = vector.load %arg2[%c0_19, %c0_20] : memref<64x256xbf16, #tpu.memory_space<vmem>>, vector<64x256xbf16>
    %cst_21 = arith.constant dense<0.000000e+00> : vector<1x256xf32>
    %56 = tpu.matmul %54, %55, %cst_21 {dimension_numbers = #tpu.dot_dimension_numbers<[1], [0], [0], [1], [0, 0, 1, 1], [], []>} : vector<1x64xbf16>, vector<64x256xbf16>, vector<1x256xf32> -> vector<1x256xf32>
    %57 = arith.addf %53, %56 : vector<1x256xf32>
    %58 = vector.extract_strided_slice %57 {offsets = [0, 0], sizes = [1, 192], strides = [1, 1]} : vector<1x256xf32> to vector<1x192xf32>
    %59 = arith.negf %58 : vector<1x192xf32>
    %60 = math.exp %59 : vector<1x192xf32>
    %cst_22 = arith.constant 1.000000e+00 : f32
    %61 = vector.broadcast %cst_22 : f32 to vector<1x192xf32>
    %62 = arith.addf %61, %60 : vector<1x192xf32>
    %63 = arith.divf %61, %62 : vector<1x192xf32>
    %64 = vector.extract_strided_slice %57 {offsets = [0, 192], sizes = [1, 64], strides = [1, 1]} : vector<1x256xf32> to vector<1x64xf32>
    %65 = math.tanh %64 : vector<1x64xf32>
    %66 = vector.extract_strided_slice %63 {offsets = [0, 0], sizes = [1, 64], strides = [1, 1]} : vector<1x192xf32> to vector<1x64xf32>
    %67 = vector.extract_strided_slice %63 {offsets = [0, 64], sizes = [1, 64], strides = [1, 1]} : vector<1x192xf32> to vector<1x64xf32>
    %68 = vector.extract_strided_slice %63 {offsets = [0, 128], sizes = [1, 64], strides = [1, 1]} : vector<1x192xf32> to vector<1x64xf32>
    %69 = arith.mulf %67, %29 : vector<1x64xf32>
    %70 = arith.mulf %66, %65 : vector<1x64xf32>
    %71 = arith.addf %69, %70 : vector<1x64xf32>
    %72 = math.tanh %71 : vector<1x64xf32>
    %73 = arith.mulf %68, %72 : vector<1x64xf32>
    %74 = tpu.concatenate %73, %52 in 1 : vector<1x64xf32>, vector<1x64xf32> -> vector<1x128xf32>
    %75 = arith.truncf %74 : vector<1x128xf32> to vector<1x128xbf16>
    %c0_23 = arith.constant 0 : index
    %c0_24 = arith.constant 0 : index
    %76 = vector.load %arg4[%c0_23, %c0_24] : memref<128x256xbf16, #tpu.memory_space<vmem>>, vector<128x256xbf16>
    %cst_25 = arith.constant dense<0.000000e+00> : vector<1x256xf32>
    %77 = tpu.matmul %75, %76, %cst_25 {dimension_numbers = #tpu.dot_dimension_numbers<[1], [0], [0], [1], [0, 0, 1, 1], [], []>} : vector<1x128xbf16>, vector<128x256xbf16>, vector<1x256xf32> -> vector<1x256xf32>
    %78 = arith.addf %77, %6 : vector<1x256xf32>
    %79 = vector.extract_strided_slice %78 {offsets = [0, 0], sizes = [1, 192], strides = [1, 1]} : vector<1x256xf32> to vector<1x192xf32>
    %80 = arith.negf %79 : vector<1x192xf32>
    %81 = math.exp %80 : vector<1x192xf32>
    %cst_26 = arith.constant 1.000000e+00 : f32
    %82 = vector.broadcast %cst_26 : f32 to vector<1x192xf32>
    %83 = arith.addf %82, %81 : vector<1x192xf32>
    %84 = arith.divf %82, %83 : vector<1x192xf32>
    %85 = vector.extract_strided_slice %78 {offsets = [0, 192], sizes = [1, 64], strides = [1, 1]} : vector<1x256xf32> to vector<1x64xf32>
    %86 = math.tanh %85 : vector<1x64xf32>
    %87 = vector.extract_strided_slice %84 {offsets = [0, 0], sizes = [1, 64], strides = [1, 1]} : vector<1x192xf32> to vector<1x64xf32>
    %88 = vector.extract_strided_slice %84 {offsets = [0, 64], sizes = [1, 64], strides = [1, 1]} : vector<1x192xf32> to vector<1x64xf32>
    %89 = vector.extract_strided_slice %84 {offsets = [0, 128], sizes = [1, 64], strides = [1, 1]} : vector<1x192xf32> to vector<1x64xf32>
    %90 = arith.mulf %88, %50 : vector<1x64xf32>
    %91 = arith.mulf %87, %86 : vector<1x64xf32>
    %92 = arith.addf %90, %91 : vector<1x64xf32>
    %93 = math.tanh %92 : vector<1x64xf32>
    %94 = arith.mulf %89, %93 : vector<1x64xf32>
    %95 = vector.extract_strided_slice %5 {offsets = [2, 0], sizes = [1, 256], strides = [1, 1]} : vector<8x256xf32> to vector<1x256xf32>
    %96 = arith.truncf %73 : vector<1x64xf32> to vector<1x64xbf16>
    %c0_27 = arith.constant 0 : index
    %c0_28 = arith.constant 0 : index
    %97 = vector.load %arg2[%c0_27, %c0_28] : memref<64x256xbf16, #tpu.memory_space<vmem>>, vector<64x256xbf16>
    %cst_29 = arith.constant dense<0.000000e+00> : vector<1x256xf32>
    %98 = tpu.matmul %96, %97, %cst_29 {dimension_numbers = #tpu.dot_dimension_numbers<[1], [0], [0], [1], [0, 0, 1, 1], [], []>} : vector<1x64xbf16>, vector<64x256xbf16>, vector<1x256xf32> -> vector<1x256xf32>
    %99 = arith.addf %95, %98 : vector<1x256xf32>
    %100 = vector.extract_strided_slice %99 {offsets = [0, 0], sizes = [1, 192], strides = [1, 1]} : vector<1x256xf32> to vector<1x192xf32>
    %101 = arith.negf %100 : vector<1x192xf32>
    %102 = math.exp %101 : vector<1x192xf32>
    %cst_30 = arith.constant 1.000000e+00 : f32
    %103 = vector.broadcast %cst_30 : f32 to vector<1x192xf32>
    %104 = arith.addf %103, %102 : vector<1x192xf32>
    %105 = arith.divf %103, %104 : vector<1x192xf32>
    %106 = vector.extract_strided_slice %99 {offsets = [0, 192], sizes = [1, 64], strides = [1, 1]} : vector<1x256xf32> to vector<1x64xf32>
    %107 = math.tanh %106 : vector<1x64xf32>
    %108 = vector.extract_strided_slice %105 {offsets = [0, 0], sizes = [1, 64], strides = [1, 1]} : vector<1x192xf32> to vector<1x64xf32>
    %109 = vector.extract_strided_slice %105 {offsets = [0, 64], sizes = [1, 64], strides = [1, 1]} : vector<1x192xf32> to vector<1x64xf32>
    %110 = vector.extract_strided_slice %105 {offsets = [0, 128], sizes = [1, 64], strides = [1, 1]} : vector<1x192xf32> to vector<1x64xf32>
    %111 = arith.mulf %109, %71 : vector<1x64xf32>
    %112 = arith.mulf %108, %107 : vector<1x64xf32>
    %113 = arith.addf %111, %112 : vector<1x64xf32>
    %114 = math.tanh %113 : vector<1x64xf32>
    %115 = arith.mulf %110, %114 : vector<1x64xf32>
    %116 = tpu.concatenate %115, %94 in 1 : vector<1x64xf32>, vector<1x64xf32> -> vector<1x128xf32>
    %117 = arith.truncf %116 : vector<1x128xf32> to vector<1x128xbf16>
    %c0_31 = arith.constant 0 : index
    %c0_32 = arith.constant 0 : index
    %118 = vector.load %arg4[%c0_31, %c0_32] : memref<128x256xbf16, #tpu.memory_space<vmem>>, vector<128x256xbf16>
    %cst_33 = arith.constant dense<0.000000e+00> : vector<1x256xf32>
    %119 = tpu.matmul %117, %118, %cst_33 {dimension_numbers = #tpu.dot_dimension_numbers<[1], [0], [0], [1], [0, 0, 1, 1], [], []>} : vector<1x128xbf16>, vector<128x256xbf16>, vector<1x256xf32> -> vector<1x256xf32>
    %120 = arith.addf %119, %6 : vector<1x256xf32>
    %121 = vector.extract_strided_slice %120 {offsets = [0, 0], sizes = [1, 192], strides = [1, 1]} : vector<1x256xf32> to vector<1x192xf32>
    %122 = arith.negf %121 : vector<1x192xf32>
    %123 = math.exp %122 : vector<1x192xf32>
    %cst_34 = arith.constant 1.000000e+00 : f32
    %124 = vector.broadcast %cst_34 : f32 to vector<1x192xf32>
    %125 = arith.addf %124, %123 : vector<1x192xf32>
    %126 = arith.divf %124, %125 : vector<1x192xf32>
    %127 = vector.extract_strided_slice %120 {offsets = [0, 192], sizes = [1, 64], strides = [1, 1]} : vector<1x256xf32> to vector<1x64xf32>
    %128 = math.tanh %127 : vector<1x64xf32>
    %129 = vector.extract_strided_slice %126 {offsets = [0, 0], sizes = [1, 64], strides = [1, 1]} : vector<1x192xf32> to vector<1x64xf32>
    %130 = vector.extract_strided_slice %126 {offsets = [0, 64], sizes = [1, 64], strides = [1, 1]} : vector<1x192xf32> to vector<1x64xf32>
    %131 = vector.extract_strided_slice %126 {offsets = [0, 128], sizes = [1, 64], strides = [1, 1]} : vector<1x192xf32> to vector<1x64xf32>
    %132 = arith.mulf %130, %92 : vector<1x64xf32>
    %133 = arith.mulf %129, %128 : vector<1x64xf32>
    %134 = arith.addf %132, %133 : vector<1x64xf32>
    %135 = math.tanh %134 : vector<1x64xf32>
    %136 = arith.mulf %131, %135 : vector<1x64xf32>
    %137 = vector.extract_strided_slice %5 {offsets = [3, 0], sizes = [1, 256], strides = [1, 1]} : vector<8x256xf32> to vector<1x256xf32>
    %138 = arith.truncf %115 : vector<1x64xf32> to vector<1x64xbf16>
    %c0_35 = arith.constant 0 : index
    %c0_36 = arith.constant 0 : index
    %139 = vector.load %arg2[%c0_35, %c0_36] : memref<64x256xbf16, #tpu.memory_space<vmem>>, vector<64x256xbf16>
    %cst_37 = arith.constant dense<0.000000e+00> : vector<1x256xf32>
    %140 = tpu.matmul %138, %139, %cst_37 {dimension_numbers = #tpu.dot_dimension_numbers<[1], [0], [0], [1], [0, 0, 1, 1], [], []>} : vector<1x64xbf16>, vector<64x256xbf16>, vector<1x256xf32> -> vector<1x256xf32>
    %141 = arith.addf %137, %140 : vector<1x256xf32>
    %142 = vector.extract_strided_slice %141 {offsets = [0, 0], sizes = [1, 192], strides = [1, 1]} : vector<1x256xf32> to vector<1x192xf32>
    %143 = arith.negf %142 : vector<1x192xf32>
    %144 = math.exp %143 : vector<1x192xf32>
    %cst_38 = arith.constant 1.000000e+00 : f32
    %145 = vector.broadcast %cst_38 : f32 to vector<1x192xf32>
    %146 = arith.addf %145, %144 : vector<1x192xf32>
    %147 = arith.divf %145, %146 : vector<1x192xf32>
    %148 = vector.extract_strided_slice %141 {offsets = [0, 192], sizes = [1, 64], strides = [1, 1]} : vector<1x256xf32> to vector<1x64xf32>
    %149 = math.tanh %148 : vector<1x64xf32>
    %150 = vector.extract_strided_slice %147 {offsets = [0, 0], sizes = [1, 64], strides = [1, 1]} : vector<1x192xf32> to vector<1x64xf32>
    %151 = vector.extract_strided_slice %147 {offsets = [0, 64], sizes = [1, 64], strides = [1, 1]} : vector<1x192xf32> to vector<1x64xf32>
    %152 = vector.extract_strided_slice %147 {offsets = [0, 128], sizes = [1, 64], strides = [1, 1]} : vector<1x192xf32> to vector<1x64xf32>
    %153 = arith.mulf %151, %113 : vector<1x64xf32>
    %154 = arith.mulf %150, %149 : vector<1x64xf32>
    %155 = arith.addf %153, %154 : vector<1x64xf32>
    %156 = math.tanh %155 : vector<1x64xf32>
    %157 = arith.mulf %152, %156 : vector<1x64xf32>
    %158 = tpu.concatenate %157, %136 in 1 : vector<1x64xf32>, vector<1x64xf32> -> vector<1x128xf32>
    %159 = arith.truncf %158 : vector<1x128xf32> to vector<1x128xbf16>
    %c0_39 = arith.constant 0 : index
    %c0_40 = arith.constant 0 : index
    %160 = vector.load %arg4[%c0_39, %c0_40] : memref<128x256xbf16, #tpu.memory_space<vmem>>, vector<128x256xbf16>
    %cst_41 = arith.constant dense<0.000000e+00> : vector<1x256xf32>
    %161 = tpu.matmul %159, %160, %cst_41 {dimension_numbers = #tpu.dot_dimension_numbers<[1], [0], [0], [1], [0, 0, 1, 1], [], []>} : vector<1x128xbf16>, vector<128x256xbf16>, vector<1x256xf32> -> vector<1x256xf32>
    %162 = arith.addf %161, %6 : vector<1x256xf32>
    %163 = vector.extract_strided_slice %162 {offsets = [0, 0], sizes = [1, 192], strides = [1, 1]} : vector<1x256xf32> to vector<1x192xf32>
    %164 = arith.negf %163 : vector<1x192xf32>
    %165 = math.exp %164 : vector<1x192xf32>
    %cst_42 = arith.constant 1.000000e+00 : f32
    %166 = vector.broadcast %cst_42 : f32 to vector<1x192xf32>
    %167 = arith.addf %166, %165 : vector<1x192xf32>
    %168 = arith.divf %166, %167 : vector<1x192xf32>
    %169 = vector.extract_strided_slice %162 {offsets = [0, 192], sizes = [1, 64], strides = [1, 1]} : vector<1x256xf32> to vector<1x64xf32>
    %170 = math.tanh %169 : vector<1x64xf32>
    %171 = vector.extract_strided_slice %168 {offsets = [0, 0], sizes = [1, 64], strides = [1, 1]} : vector<1x192xf32> to vector<1x64xf32>
    %172 = vector.extract_strided_slice %168 {offsets = [0, 64], sizes = [1, 64], strides = [1, 1]} : vector<1x192xf32> to vector<1x64xf32>
    %173 = vector.extract_strided_slice %168 {offsets = [0, 128], sizes = [1, 64], strides = [1, 1]} : vector<1x192xf32> to vector<1x64xf32>
    %174 = arith.mulf %172, %134 : vector<1x64xf32>
    %175 = arith.mulf %171, %170 : vector<1x64xf32>
    %176 = arith.addf %174, %175 : vector<1x64xf32>
    %177 = math.tanh %176 : vector<1x64xf32>
    %178 = arith.mulf %173, %177 : vector<1x64xf32>
    %179 = vector.extract_strided_slice %5 {offsets = [4, 0], sizes = [1, 256], strides = [1, 1]} : vector<8x256xf32> to vector<1x256xf32>
    %180 = arith.truncf %157 : vector<1x64xf32> to vector<1x64xbf16>
    %c0_43 = arith.constant 0 : index
    %c0_44 = arith.constant 0 : index
    %181 = vector.load %arg2[%c0_43, %c0_44] : memref<64x256xbf16, #tpu.memory_space<vmem>>, vector<64x256xbf16>
    %cst_45 = arith.constant dense<0.000000e+00> : vector<1x256xf32>
    %182 = tpu.matmul %180, %181, %cst_45 {dimension_numbers = #tpu.dot_dimension_numbers<[1], [0], [0], [1], [0, 0, 1, 1], [], []>} : vector<1x64xbf16>, vector<64x256xbf16>, vector<1x256xf32> -> vector<1x256xf32>
    %183 = arith.addf %179, %182 : vector<1x256xf32>
    %184 = vector.extract_strided_slice %183 {offsets = [0, 0], sizes = [1, 192], strides = [1, 1]} : vector<1x256xf32> to vector<1x192xf32>
    %185 = arith.negf %184 : vector<1x192xf32>
    %186 = math.exp %185 : vector<1x192xf32>
    %cst_46 = arith.constant 1.000000e+00 : f32
    %187 = vector.broadcast %cst_46 : f32 to vector<1x192xf32>
    %188 = arith.addf %187, %186 : vector<1x192xf32>
    %189 = arith.divf %187, %188 : vector<1x192xf32>
    %190 = vector.extract_strided_slice %183 {offsets = [0, 192], sizes = [1, 64], strides = [1, 1]} : vector<1x256xf32> to vector<1x64xf32>
    %191 = math.tanh %190 : vector<1x64xf32>
    %192 = vector.extract_strided_slice %189 {offsets = [0, 0], sizes = [1, 64], strides = [1, 1]} : vector<1x192xf32> to vector<1x64xf32>
    %193 = vector.extract_strided_slice %189 {offsets = [0, 64], sizes = [1, 64], strides = [1, 1]} : vector<1x192xf32> to vector<1x64xf32>
    %194 = vector.extract_strided_slice %189 {offsets = [0, 128], sizes = [1, 64], strides = [1, 1]} : vector<1x192xf32> to vector<1x64xf32>
    %195 = arith.mulf %193, %155 : vector<1x64xf32>
    %196 = arith.mulf %192, %191 : vector<1x64xf32>
    %197 = arith.addf %195, %196 : vector<1x64xf32>
    %198 = math.tanh %197 : vector<1x64xf32>
    %199 = arith.mulf %194, %198 : vector<1x64xf32>
    %200 = tpu.concatenate %199, %178 in 1 : vector<1x64xf32>, vector<1x64xf32> -> vector<1x128xf32>
    %201 = arith.truncf %200 : vector<1x128xf32> to vector<1x128xbf16>
    %c0_47 = arith.constant 0 : index
    %c0_48 = arith.constant 0 : index
    %202 = vector.load %arg4[%c0_47, %c0_48] : memref<128x256xbf16, #tpu.memory_space<vmem>>, vector<128x256xbf16>
    %cst_49 = arith.constant dense<0.000000e+00> : vector<1x256xf32>
    %203 = tpu.matmul %201, %202, %cst_49 {dimension_numbers = #tpu.dot_dimension_numbers<[1], [0], [0], [1], [0, 0, 1, 1], [], []>} : vector<1x128xbf16>, vector<128x256xbf16>, vector<1x256xf32> -> vector<1x256xf32>
    %204 = arith.addf %203, %6 : vector<1x256xf32>
    %205 = vector.extract_strided_slice %204 {offsets = [0, 0], sizes = [1, 192], strides = [1, 1]} : vector<1x256xf32> to vector<1x192xf32>
    %206 = arith.negf %205 : vector<1x192xf32>
    %207 = math.exp %206 : vector<1x192xf32>
    %cst_50 = arith.constant 1.000000e+00 : f32
    %208 = vector.broadcast %cst_50 : f32 to vector<1x192xf32>
    %209 = arith.addf %208, %207 : vector<1x192xf32>
    %210 = arith.divf %208, %209 : vector<1x192xf32>
    %211 = vector.extract_strided_slice %204 {offsets = [0, 192], sizes = [1, 64], strides = [1, 1]} : vector<1x256xf32> to vector<1x64xf32>
    %212 = math.tanh %211 : vector<1x64xf32>
    %213 = vector.extract_strided_slice %210 {offsets = [0, 0], sizes = [1, 64], strides = [1, 1]} : vector<1x192xf32> to vector<1x64xf32>
    %214 = vector.extract_strided_slice %210 {offsets = [0, 64], sizes = [1, 64], strides = [1, 1]} : vector<1x192xf32> to vector<1x64xf32>
    %215 = vector.extract_strided_slice %210 {offsets = [0, 128], sizes = [1, 64], strides = [1, 1]} : vector<1x192xf32> to vector<1x64xf32>
    %216 = arith.mulf %214, %176 : vector<1x64xf32>
    %217 = arith.mulf %213, %212 : vector<1x64xf32>
    %218 = arith.addf %216, %217 : vector<1x64xf32>
    %219 = math.tanh %218 : vector<1x64xf32>
    %220 = arith.mulf %215, %219 : vector<1x64xf32>
    %221 = vector.extract_strided_slice %5 {offsets = [5, 0], sizes = [1, 256], strides = [1, 1]} : vector<8x256xf32> to vector<1x256xf32>
    %222 = arith.truncf %199 : vector<1x64xf32> to vector<1x64xbf16>
    %c0_51 = arith.constant 0 : index
    %c0_52 = arith.constant 0 : index
    %223 = vector.load %arg2[%c0_51, %c0_52] : memref<64x256xbf16, #tpu.memory_space<vmem>>, vector<64x256xbf16>
    %cst_53 = arith.constant dense<0.000000e+00> : vector<1x256xf32>
    %224 = tpu.matmul %222, %223, %cst_53 {dimension_numbers = #tpu.dot_dimension_numbers<[1], [0], [0], [1], [0, 0, 1, 1], [], []>} : vector<1x64xbf16>, vector<64x256xbf16>, vector<1x256xf32> -> vector<1x256xf32>
    %225 = arith.addf %221, %224 : vector<1x256xf32>
    %226 = vector.extract_strided_slice %225 {offsets = [0, 0], sizes = [1, 192], strides = [1, 1]} : vector<1x256xf32> to vector<1x192xf32>
    %227 = arith.negf %226 : vector<1x192xf32>
    %228 = math.exp %227 : vector<1x192xf32>
    %cst_54 = arith.constant 1.000000e+00 : f32
    %229 = vector.broadcast %cst_54 : f32 to vector<1x192xf32>
    %230 = arith.addf %229, %228 : vector<1x192xf32>
    %231 = arith.divf %229, %230 : vector<1x192xf32>
    %232 = vector.extract_strided_slice %225 {offsets = [0, 192], sizes = [1, 64], strides = [1, 1]} : vector<1x256xf32> to vector<1x64xf32>
    %233 = math.tanh %232 : vector<1x64xf32>
    %234 = vector.extract_strided_slice %231 {offsets = [0, 0], sizes = [1, 64], strides = [1, 1]} : vector<1x192xf32> to vector<1x64xf32>
    %235 = vector.extract_strided_slice %231 {offsets = [0, 64], sizes = [1, 64], strides = [1, 1]} : vector<1x192xf32> to vector<1x64xf32>
    %236 = vector.extract_strided_slice %231 {offsets = [0, 128], sizes = [1, 64], strides = [1, 1]} : vector<1x192xf32> to vector<1x64xf32>
    %237 = arith.mulf %235, %197 : vector<1x64xf32>
    %238 = arith.mulf %234, %233 : vector<1x64xf32>
    %239 = arith.addf %237, %238 : vector<1x64xf32>
    %240 = math.tanh %239 : vector<1x64xf32>
    %241 = arith.mulf %236, %240 : vector<1x64xf32>
    %242 = tpu.concatenate %241, %220 in 1 : vector<1x64xf32>, vector<1x64xf32> -> vector<1x128xf32>
    %243 = arith.truncf %242 : vector<1x128xf32> to vector<1x128xbf16>
    %c0_55 = arith.constant 0 : index
    %c0_56 = arith.constant 0 : index
    %244 = vector.load %arg4[%c0_55, %c0_56] : memref<128x256xbf16, #tpu.memory_space<vmem>>, vector<128x256xbf16>
    %cst_57 = arith.constant dense<0.000000e+00> : vector<1x256xf32>
    %245 = tpu.matmul %243, %244, %cst_57 {dimension_numbers = #tpu.dot_dimension_numbers<[1], [0], [0], [1], [0, 0, 1, 1], [], []>} : vector<1x128xbf16>, vector<128x256xbf16>, vector<1x256xf32> -> vector<1x256xf32>
    %246 = arith.addf %245, %6 : vector<1x256xf32>
    %247 = vector.extract_strided_slice %246 {offsets = [0, 0], sizes = [1, 192], strides = [1, 1]} : vector<1x256xf32> to vector<1x192xf32>
    %248 = arith.negf %247 : vector<1x192xf32>
    %249 = math.exp %248 : vector<1x192xf32>
    %cst_58 = arith.constant 1.000000e+00 : f32
    %250 = vector.broadcast %cst_58 : f32 to vector<1x192xf32>
    %251 = arith.addf %250, %249 : vector<1x192xf32>
    %252 = arith.divf %250, %251 : vector<1x192xf32>
    %253 = vector.extract_strided_slice %246 {offsets = [0, 192], sizes = [1, 64], strides = [1, 1]} : vector<1x256xf32> to vector<1x64xf32>
    %254 = math.tanh %253 : vector<1x64xf32>
    %255 = vector.extract_strided_slice %252 {offsets = [0, 0], sizes = [1, 64], strides = [1, 1]} : vector<1x192xf32> to vector<1x64xf32>
    %256 = vector.extract_strided_slice %252 {offsets = [0, 64], sizes = [1, 64], strides = [1, 1]} : vector<1x192xf32> to vector<1x64xf32>
    %257 = vector.extract_strided_slice %252 {offsets = [0, 128], sizes = [1, 64], strides = [1, 1]} : vector<1x192xf32> to vector<1x64xf32>
    %258 = arith.mulf %256, %218 : vector<1x64xf32>
    %259 = arith.mulf %255, %254 : vector<1x64xf32>
    %260 = arith.addf %258, %259 : vector<1x64xf32>
    %261 = math.tanh %260 : vector<1x64xf32>
    %262 = arith.mulf %257, %261 : vector<1x64xf32>
    %263 = vector.extract_strided_slice %5 {offsets = [6, 0], sizes = [1, 256], strides = [1, 1]} : vector<8x256xf32> to vector<1x256xf32>
    %264 = arith.truncf %241 : vector<1x64xf32> to vector<1x64xbf16>
    %c0_59 = arith.constant 0 : index
    %c0_60 = arith.constant 0 : index
    %265 = vector.load %arg2[%c0_59, %c0_60] : memref<64x256xbf16, #tpu.memory_space<vmem>>, vector<64x256xbf16>
    %cst_61 = arith.constant dense<0.000000e+00> : vector<1x256xf32>
    %266 = tpu.matmul %264, %265, %cst_61 {dimension_numbers = #tpu.dot_dimension_numbers<[1], [0], [0], [1], [0, 0, 1, 1], [], []>} : vector<1x64xbf16>, vector<64x256xbf16>, vector<1x256xf32> -> vector<1x256xf32>
    %267 = arith.addf %263, %266 : vector<1x256xf32>
    %268 = vector.extract_strided_slice %267 {offsets = [0, 0], sizes = [1, 192], strides = [1, 1]} : vector<1x256xf32> to vector<1x192xf32>
    %269 = arith.negf %268 : vector<1x192xf32>
    %270 = math.exp %269 : vector<1x192xf32>
    %cst_62 = arith.constant 1.000000e+00 : f32
    %271 = vector.broadcast %cst_62 : f32 to vector<1x192xf32>
    %272 = arith.addf %271, %270 : vector<1x192xf32>
    %273 = arith.divf %271, %272 : vector<1x192xf32>
    %274 = vector.extract_strided_slice %267 {offsets = [0, 192], sizes = [1, 64], strides = [1, 1]} : vector<1x256xf32> to vector<1x64xf32>
    %275 = math.tanh %274 : vector<1x64xf32>
    %276 = vector.extract_strided_slice %273 {offsets = [0, 0], sizes = [1, 64], strides = [1, 1]} : vector<1x192xf32> to vector<1x64xf32>
    %277 = vector.extract_strided_slice %273 {offsets = [0, 64], sizes = [1, 64], strides = [1, 1]} : vector<1x192xf32> to vector<1x64xf32>
    %278 = vector.extract_strided_slice %273 {offsets = [0, 128], sizes = [1, 64], strides = [1, 1]} : vector<1x192xf32> to vector<1x64xf32>
    %279 = arith.mulf %277, %239 : vector<1x64xf32>
    %280 = arith.mulf %276, %275 : vector<1x64xf32>
    %281 = arith.addf %279, %280 : vector<1x64xf32>
    %282 = math.tanh %281 : vector<1x64xf32>
    %283 = arith.mulf %278, %282 : vector<1x64xf32>
    %284 = tpu.concatenate %283, %262 in 1 : vector<1x64xf32>, vector<1x64xf32> -> vector<1x128xf32>
    %285 = arith.truncf %284 : vector<1x128xf32> to vector<1x128xbf16>
    %c0_63 = arith.constant 0 : index
    %c0_64 = arith.constant 0 : index
    %286 = vector.load %arg4[%c0_63, %c0_64] : memref<128x256xbf16, #tpu.memory_space<vmem>>, vector<128x256xbf16>
    %cst_65 = arith.constant dense<0.000000e+00> : vector<1x256xf32>
    %287 = tpu.matmul %285, %286, %cst_65 {dimension_numbers = #tpu.dot_dimension_numbers<[1], [0], [0], [1], [0, 0, 1, 1], [], []>} : vector<1x128xbf16>, vector<128x256xbf16>, vector<1x256xf32> -> vector<1x256xf32>
    %288 = arith.addf %287, %6 : vector<1x256xf32>
    %289 = vector.extract_strided_slice %288 {offsets = [0, 0], sizes = [1, 192], strides = [1, 1]} : vector<1x256xf32> to vector<1x192xf32>
    %290 = arith.negf %289 : vector<1x192xf32>
    %291 = math.exp %290 : vector<1x192xf32>
    %cst_66 = arith.constant 1.000000e+00 : f32
    %292 = vector.broadcast %cst_66 : f32 to vector<1x192xf32>
    %293 = arith.addf %292, %291 : vector<1x192xf32>
    %294 = arith.divf %292, %293 : vector<1x192xf32>
    %295 = vector.extract_strided_slice %288 {offsets = [0, 192], sizes = [1, 64], strides = [1, 1]} : vector<1x256xf32> to vector<1x64xf32>
    %296 = math.tanh %295 : vector<1x64xf32>
    %297 = vector.extract_strided_slice %294 {offsets = [0, 0], sizes = [1, 64], strides = [1, 1]} : vector<1x192xf32> to vector<1x64xf32>
    %298 = vector.extract_strided_slice %294 {offsets = [0, 64], sizes = [1, 64], strides = [1, 1]} : vector<1x192xf32> to vector<1x64xf32>
    %299 = vector.extract_strided_slice %294 {offsets = [0, 128], sizes = [1, 64], strides = [1, 1]} : vector<1x192xf32> to vector<1x64xf32>
    %300 = arith.mulf %298, %260 : vector<1x64xf32>
    %301 = arith.mulf %297, %296 : vector<1x64xf32>
    %302 = arith.addf %300, %301 : vector<1x64xf32>
    %303 = math.tanh %302 : vector<1x64xf32>
    %304 = arith.mulf %299, %303 : vector<1x64xf32>
    %305 = vector.extract_strided_slice %5 {offsets = [7, 0], sizes = [1, 256], strides = [1, 1]} : vector<8x256xf32> to vector<1x256xf32>
    %306 = arith.truncf %283 : vector<1x64xf32> to vector<1x64xbf16>
    %c0_67 = arith.constant 0 : index
    %c0_68 = arith.constant 0 : index
    %307 = vector.load %arg2[%c0_67, %c0_68] : memref<64x256xbf16, #tpu.memory_space<vmem>>, vector<64x256xbf16>
    %cst_69 = arith.constant dense<0.000000e+00> : vector<1x256xf32>
    %308 = tpu.matmul %306, %307, %cst_69 {dimension_numbers = #tpu.dot_dimension_numbers<[1], [0], [0], [1], [0, 0, 1, 1], [], []>} : vector<1x64xbf16>, vector<64x256xbf16>, vector<1x256xf32> -> vector<1x256xf32>
    %309 = arith.addf %305, %308 : vector<1x256xf32>
    %310 = vector.extract_strided_slice %309 {offsets = [0, 0], sizes = [1, 192], strides = [1, 1]} : vector<1x256xf32> to vector<1x192xf32>
    %311 = arith.negf %310 : vector<1x192xf32>
    %312 = math.exp %311 : vector<1x192xf32>
    %cst_70 = arith.constant 1.000000e+00 : f32
    %313 = vector.broadcast %cst_70 : f32 to vector<1x192xf32>
    %314 = arith.addf %313, %312 : vector<1x192xf32>
    %315 = arith.divf %313, %314 : vector<1x192xf32>
    %316 = vector.extract_strided_slice %309 {offsets = [0, 192], sizes = [1, 64], strides = [1, 1]} : vector<1x256xf32> to vector<1x64xf32>
    %317 = math.tanh %316 : vector<1x64xf32>
    %318 = vector.extract_strided_slice %315 {offsets = [0, 0], sizes = [1, 64], strides = [1, 1]} : vector<1x192xf32> to vector<1x64xf32>
    %319 = vector.extract_strided_slice %315 {offsets = [0, 64], sizes = [1, 64], strides = [1, 1]} : vector<1x192xf32> to vector<1x64xf32>
    %320 = vector.extract_strided_slice %315 {offsets = [0, 128], sizes = [1, 64], strides = [1, 1]} : vector<1x192xf32> to vector<1x64xf32>
    %321 = arith.mulf %319, %281 : vector<1x64xf32>
    %322 = arith.mulf %318, %317 : vector<1x64xf32>
    %323 = arith.addf %321, %322 : vector<1x64xf32>
    %324 = math.tanh %323 : vector<1x64xf32>
    %325 = arith.mulf %320, %324 : vector<1x64xf32>
    %326 = tpu.concatenate %325, %304 in 1 : vector<1x64xf32>, vector<1x64xf32> -> vector<1x128xf32>
    %327 = arith.truncf %326 : vector<1x128xf32> to vector<1x128xbf16>
    %c0_71 = arith.constant 0 : index
    %c0_72 = arith.constant 0 : index
    %328 = vector.load %arg4[%c0_71, %c0_72] : memref<128x256xbf16, #tpu.memory_space<vmem>>, vector<128x256xbf16>
    %cst_73 = arith.constant dense<0.000000e+00> : vector<1x256xf32>
    %329 = tpu.matmul %327, %328, %cst_73 {dimension_numbers = #tpu.dot_dimension_numbers<[1], [0], [0], [1], [0, 0, 1, 1], [], []>} : vector<1x128xbf16>, vector<128x256xbf16>, vector<1x256xf32> -> vector<1x256xf32>
    %330 = arith.addf %329, %6 : vector<1x256xf32>
    %331 = vector.extract_strided_slice %330 {offsets = [0, 0], sizes = [1, 192], strides = [1, 1]} : vector<1x256xf32> to vector<1x192xf32>
    %332 = arith.negf %331 : vector<1x192xf32>
    %333 = math.exp %332 : vector<1x192xf32>
    %cst_74 = arith.constant 1.000000e+00 : f32
    %334 = vector.broadcast %cst_74 : f32 to vector<1x192xf32>
    %335 = arith.addf %334, %333 : vector<1x192xf32>
    %336 = arith.divf %334, %335 : vector<1x192xf32>
    %337 = vector.extract_strided_slice %330 {offsets = [0, 192], sizes = [1, 64], strides = [1, 1]} : vector<1x256xf32> to vector<1x64xf32>
    %338 = math.tanh %337 : vector<1x64xf32>
    %339 = vector.extract_strided_slice %336 {offsets = [0, 0], sizes = [1, 64], strides = [1, 1]} : vector<1x192xf32> to vector<1x64xf32>
    %340 = vector.extract_strided_slice %336 {offsets = [0, 64], sizes = [1, 64], strides = [1, 1]} : vector<1x192xf32> to vector<1x64xf32>
    %341 = vector.extract_strided_slice %336 {offsets = [0, 128], sizes = [1, 64], strides = [1, 1]} : vector<1x192xf32> to vector<1x64xf32>
    %342 = arith.mulf %340, %302 : vector<1x64xf32>
    %343 = arith.mulf %339, %338 : vector<1x64xf32>
    %344 = arith.addf %342, %343 : vector<1x64xf32>
    %345 = math.tanh %344 : vector<1x64xf32>
    %346 = arith.mulf %341, %345 : vector<1x64xf32>
    %347 = arith.truncf %346 : vector<1x64xf32> to vector<1x64xbf16>
    %c0_75 = arith.constant 0 : index
    %c0_76 = arith.constant 0 : index
    %348 = vector.load %arg6[%c0_75, %c0_76] : memref<64x128xbf16, #tpu.memory_space<vmem>>, vector<64x128xbf16>
    %cst_77 = arith.constant dense<0.000000e+00> : vector<1x128xf32>
    %349 = tpu.matmul %347, %348, %cst_77 {dimension_numbers = #tpu.dot_dimension_numbers<[1], [0], [0], [1], [0, 0, 1, 1], [], []>} : vector<1x64xbf16>, vector<64x128xbf16>, vector<1x128xf32> -> vector<1x128xf32>
    %c0_78 = arith.constant 0 : index
    %c0_79 = arith.constant 0 : index
    %350 = vector.load %arg7[%c0_78, %c0_79] : memref<1x128xf32, #tpu.memory_space<vmem>>, vector<1x128xf32>
    %351 = arith.addf %349, %350 : vector<1x128xf32>
    %c0_80 = arith.constant 0 : index
    %c0_81 = arith.constant 0 : index
    %352 = vector.load %arg8[%c0_80, %c0_81] : memref<1x128xf32, #tpu.memory_space<vmem>>, vector<1x128xf32>
    tpu.vector_store %arg8[%c0_80, %c0_81], %351 {strides = array<i32>} : memref<1x128xf32, #tpu.memory_space<vmem>>, vector<1x128xf32>,
    return
  }
}

</mosaic_0001>

<llo_original>
// kernel: forward.1
$region0: #{forward.1}
  #allocation0 [shape = 'u32[]', space=smem, size = 0x4, offset = 0x4, fixed_abs, tag = 'smem constant byte address 0x4 - core index']
  #allocation1 [shape = 'u32[144,128]{1,0:T(1,128)}', space=vmem, size = 0x12000, scoped, tag = 'internal scratch']
  %s0 = inlined_call_operand.vmem [shape: bf16[8,8], index: 0, kind: input, shape index: {}]
  %s1 = inlined_call_operand.vmem [shape: bf16[8,256], index: 1, kind: input, shape index: {}]
  %s2 = inlined_call_operand.vmem [shape: bf16[64,256], index: 2, kind: input, shape index: {}]
  %s3 = inlined_call_operand.vmem [shape: f32[1,256], index: 3, kind: input, shape index: {}]
  %s4 = inlined_call_operand.vmem [shape: bf16[128,256], index: 4, kind: input, shape index: {}]
  %s5 = inlined_call_operand.vmem [shape: f32[1,256], index: 5, kind: input, shape index: {}]
  %s6 = inlined_call_operand.vmem [shape: bf16[64,128], index: 6, kind: input, shape index: {}]
  %s7 = inlined_call_operand.vmem [shape: f32[1,128], index: 7, kind: input, shape index: {}]
  %s8 = inlined_call_operand.vmem [shape: f32[1,128], index: 8, kind: output, shape index: {}]
  %s9 = sld [smem:[#allocation0]]
  $region42: #{forward.1} parent=0
    _
  %s11 = ssub.s32 1, %s9
  %s12 = scalar_select 0, %s11, %s9
  // Predicated region
  $region2: #{forward.1} parent=0 // pred_check
    _
  $region3: #{forward.1} parent=0 // pred_check_branch
    %14 = sbr.rel (0) target = $region5
  $region4: #{forward.1} parent=0 // pred_region
    _
  $region5: #{forward.1} parent=0 // pred_fallthru
    _
  // Predicated region
  $region6: #{forward.1} parent=0 // pred_check
    _
  $region7: #{forward.1} parent=0 // pred_check_branch
    %16 = sbr.rel (0) target = $region9
  $region8: #{forward.1} parent=0 // pred_region
    _
  $region9: #{forward.1} parent=0 // pred_fallthru
    _
  // Predicated region
  $region10: #{forward.1} parent=0 // pred_check
    _
  $region11: #{forward.1} parent=0 // pred_check_branch
    %18 = sbr.rel (0) target = $region13
  $region12: #{forward.1} parent=0 // pred_region
    _
  $region13: #{forward.1} parent=0 // pred_fallthru
    _
  // Predicated region
  $region14: #{forward.1} parent=0 // pred_check
    _
  $region15: #{forward.1} parent=0 // pred_check_branch
    %20 = sbr.rel (0) target = $region17
  $region16: #{forward.1} parent=0 // pred_region
    _
  $region17: #{forward.1} parent=0 // pred_fallthru
    _
  // Predicated region
  $region18: #{forward.1} parent=0 // pred_check
    _
  $region19: #{forward.1} parent=0 // pred_check_branch
    %22 = sbr.rel (0) target = $region21
  $region20: #{forward.1} parent=0 // pred_region
    _
  $region21: #{forward.1} parent=0 // pred_fallthru
    _
  // Predicated region
  $region22: #{forward.1} parent=0 // pred_check
    _
  $region23: #{forward.1} parent=0 // pred_check_branch
    %24 = sbr.rel (0) target = $region25
  $region24: #{forward.1} parent=0 // pred_region
    _
  $region25: #{forward.1} parent=0 // pred_fallthru
    _
  // Predicated region
  $region26: #{forward.1} parent=0 // pred_check
    _
  $region27: #{forward.1} parent=0 // pred_check_branch
    %26 = sbr.rel (0) target = $region29
  $region28: #{forward.1} parent=0 // pred_region
    _
  $region29: #{forward.1} parent=0 // pred_fallthru
    _
  // Predicated region
  $region30: #{forward.1} parent=0 // pred_check
    _
  $region31: #{forward.1} parent=0 // pred_check_branch
    %28 = sbr.rel (0) target = $region33
  $region32: #{forward.1} parent=0 // pred_region
    _
  $region33: #{forward.1} parent=0 // pred_fallthru
    _
  %v30 = vld [vmem:[%s0] sm:$0xf]
  %v31 = vld [vmem:[%s1] sm:$0xff]
  %v32 = vld [vmem:[%s3] sm:$0x3]
  %v34 = vlaneseq
  %v35 = vshrl.u32 %v34, 7
  %v36 = vsub.s32 0, %v35
  %v37 = vrot.slane %v32, %v36
  %v38 = vlaneseq
  %v39 = vshrl.u32 %v38, 7
  %v40 = vsub.s32 1, %v39
  %v41 = vrot.slane %v32, %v40
  %v45 = vunpack.c.l.b16 %v31
  %v46 = vunpack.c.h.b16 %v31
  %v47 = vpack.c.b16 %v45, %v45
  %v48 = vpack.c.b16 %v46, %v46
  %vm49 = vcmask 64512
  %v51 = vsel %vm49, %v30, 0
  %vm53 = vcmask 1043456
  %v55 = vsel %vm53, %v47, 0
  %v58 = vsel %vm53, %v48, 0
  %60 = vmatprep.subr.bf16.mxu0 %v58
  %61 = vmatpush1.bf16.msra.mxu0 %v55
  %62 = vmatprep.subr.bf16.mxu0 0
  %63 = vmatpush1.bf16.msra.mxu0 0
  %64 = vmatprep.subr.bf16.mxu0 0
  %65 = vmatpush1.bf16.msra.mxu0 0
  %66 = vmatprep.subr.bf16.mxu0 0
  %67 = vmatpush1.bf16.msra.mxu0 0
  %68 = vmatprep.subr.bf16.mxu0 0
  %69 = vmatpush1.bf16.msra.mxu0 0
  %70 = vmatprep.subr.bf16.mxu0 0
  %71 = vmatpush1.bf16.msra.mxu0 0
  %72 = vmatprep.subr.bf16.mxu0 0
  %73 = vmatpush1.bf16.msra.mxu0 0
  %74 = vmatprep.subr.bf16.mxu0 0
  %75 = vmatpush1.bf16.msra.mxu0 0
  %76 = vmatprep.subr.bf16.mxu0 0
  %77 = vmatpush1.bf16.msra.mxu0 0
  %78 = vmatprep.subr.bf16.mxu0 0
  %79 = vmatpush1.bf16.msra.mxu0 0
  %80 = vmatprep.subr.bf16.mxu0 0
  %81 = vmatpush1.bf16.msra.mxu0 0
  %82 = vmatprep.subr.bf16.mxu0 0
  %83 = vmatpush1.bf16.msra.mxu0 0
  %84 = vmatprep.subr.bf16.mxu0 0
  %85 = vmatpush1.bf16.msra.mxu0 0
  %86 = vmatprep.subr.bf16.mxu0 0
  %87 = vmatpush1.bf16.msra.mxu0 0
  %88 = vmatprep.subr.bf16.mxu0 0
  %89 = vmatpush1.bf16.msra.mxu0 0
  %90 = vmatprep.subr.bf16.mxu0 0
  %91 = vmatpush1.bf16.msra.mxu0 0
  %92 = vmatprep.mubr.bf16.mxu0 0
  %93 = vmatmul.mubr.bf16.gmra.mrb[0].mxu0 %v51
  %v94 = vpop.f32.mrb[0].mxu0
  %v95 = vadd.f32 %v37, %v94
  %v96 = vpop.f32.mrb[0].mxu0
  %v97 = vadd.f32 %v41, %v96
  %v98 = vpop.f32.mrb[0].mxu0
  %v99 = vpop.f32.mrb[0].mxu0
  %100 = vdwg.mxu0
  %v101 = vld [vmem:[%s5] sm:$0x3]
  %v102 = vld [vmem:[%s2] sm:$0xff]
  %v103 = vld [vmem:[%s2 + $0x8] sm:$0xff]
  %v104 = vld [vmem:[%s2 + $0x10] sm:$0xff]
  %v105 = vld [vmem:[%s2 + $0x18] sm:$0xff]
  %v106 = vld [vmem:[%s2 + $0x20] sm:$0xff]
  %v107 = vld [vmem:[%s2 + $0x28] sm:$0xff]
  %v108 = vld [vmem:[%s2 + $0x30] sm:$0xff]
  %v109 = vld [vmem:[%s2 + $0x38] sm:$0xff]
  %v118 = vunpack.c.l.b16 %v102
  %v119 = vunpack.c.h.b16 %v102
  %v120 = vunpack.c.l.b16 %v103
  %v121 = vunpack.c.h.b16 %v103
  %v122 = vunpack.c.l.b16 %v104
  %v123 = vunpack.c.h.b16 %v104
  %v124 = vunpack.c.l.b16 %v105
  %v125 = vunpack.c.h.b16 %v105
  %v126 = vunpack.c.l.b16 %v106
  %v127 = vunpack.c.h.b16 %v106
  %v128 = vunpack.c.l.b16 %v107
  %v129 = vunpack.c.h.b16 %v107
  %v130 = vunpack.c.l.b16 %v108
  %v131 = vunpack.c.h.b16 %v108
  %v132 = vunpack.c.l.b16 %v109
  %v133 = vunpack.c.h.b16 %v109
  %v134 = vpack.c.b16 %v120, %v118
  %v135 = vpack.c.b16 %v121, %v119
  %v136 = vpack.c.b16 %v124, %v122
  %v137 = vpack.c.b16 %v125, %v123
  %v138 = vpack.c.b16 %v128, %v126
  %v139 = vpack.c.b16 %v129, %v127
  %v140 = vpack.c.b16 %v132, %v130
  %v141 = vpack.c.b16 %v133, %v131
  %vm150 = vcmask 523264
  %v152 = vsel %vm150, 0, 0
  %154 = vmatprep.subr.bf16.mxu0 %v135
  %155 = vmatpush1.bf16.msra.mxu0 %v134
  %156 = vmatprep.subr.bf16.mxu0 %v137
  %157 = vmatpush1.bf16.msra.mxu0 %v136
  %158 = vmatprep.subr.bf16.mxu0 %v139
  %159 = vmatpush1.bf16.msra.mxu0 %v138
  %160 = vmatprep.subr.bf16.mxu0 %v141
  %161 = vmatpush1.bf16.msra.mxu0 %v140
  %162 = vmatprep.subr.bf16.mxu0 0
  %163 = vmatpush1.bf16.msra.mxu0 0
  %164 = vmatprep.subr.bf16.mxu0 0
  %165 = vmatpush1.bf16.msra.mxu0 0
  %166 = vmatprep.subr.bf16.mxu0 0
  %167 = vmatpush1.bf16.msra.mxu0 0
  %168 = vmatprep.subr.bf16.mxu0 0
  %169 = vmatpush1.bf16.msra.mxu0 0
  %170 = vmatprep.subr.bf16.mxu0 0
  %171 = vmatpush1.bf16.msra.mxu0 0
  %172 = vmatprep.subr.bf16.mxu0 0
  %173 = vmatpush1.bf16.msra.mxu0 0
  %174 = vmatprep.subr.bf16.mxu0 0
  %175 = vmatpush1.bf16.msra.mxu0 0
  %176 = vmatprep.subr.bf16.mxu0 0
  %177 = vmatpush1.bf16.msra.mxu0 0
  %178 = vmatprep.subr.bf16.mxu0 0
  %179 = vmatpush1.bf16.msra.mxu0 0
  %180 = vmatprep.subr.bf16.mxu0 0
  %181 = vmatpush1.bf16.msra.mxu0 0
  %182 = vmatprep.subr.bf16.mxu0 0
  %183 = vmatpush1.bf16.msra.mxu0 0
  %184 = vmatprep.subr.bf16.mxu0 0
  %185 = vmatpush1.bf16.msra.mxu0 0
  %186 = vmatprep.mubr.bf16.mxu0 0
  %187 = vmatmul.mubr.bf16.gmra.mrb[0].mxu0 %v152
  %v188 = vpop.f32.mrb[0].mxu0
  %v189 = vadd.f32 0.0, %v188
  %v190 = vpop.f32.mrb[0].mxu0
  %v191 = vadd.f32 0.0, %v190
  %v192 = vpop.f32.mrb[0].mxu0
  %v193 = vpop.f32.mrb[0].mxu0
  %194 = vdwg.mxu0
  %v195 = vadd.f32 %v95, %v189
  %v196 = vadd.f32 %v97, %v191
  %v197 = vxor.u32 %v195, 2147483648
  %v198 = vxor.u32 %v196, 2147483648
  %v199 = vmul.f32 %v197, 1.442695
  %v200 = vpow.pop %v199
  %v201 = vmul.f32 %v198, 1.442695
  %v202 = vpow.pop %v201
  %v203 = vadd.f32 %v200, 1.0
  %v204 = vadd.f32 %v202, 1.0
  %v205 = vrcp.pop %v203
  %v206 = vmul.f32 1.0, %v205
  %v207 = vrcp.pop %v204
  %v208 = vmul.f32 1.0, %v207
  %v209 = vtanh.pop %v196
  %v210 = vmul.f32 %v206, 0.0
  %212 = vrot.lane.b32.xlu0 %v209, 64
  %v213 = vpop.permute.xlu0 %212
  %v215 = vmul.f32 %v206, %v213
  %217 = vrot.lane.b32.xlu0 %v215, 64
  %v218 = vpop.permute.xlu0 %217
  %v220 = vadd.f32 %v210, %v218
  %v221 = vtanh.pop %v220
  %223 = vrot.lane.b32.xlu0 %v221, 64
  %v224 = vpop.permute.xlu0 %223
  %v226 = vmul.f32 %v208, %v224
  %v227 = vsel %vm150, %v226, 0.0
  %v228 = vpack.c.bf16 %v227, %v227
  %v229 = vld [vmem:[%s4] sm:$0xff]
  %v230 = vld [vmem:[%s4 + $0x8] sm:$0xff]
  %v231 = vld [vmem:[%s4 + $0x10] sm:$0xff]
  %v232 = vld [vmem:[%s4 + $0x18] sm:$0xff]
  %v233 = vld [vmem:[%s4 + $0x20] sm:$0xff]
  %v234 = vld [vmem:[%s4 + $0x28] sm:$0xff]
  %v235 = vld [vmem:[%s4 + $0x30] sm:$0xff]
  %v236 = vld [vmem:[%s4 + $0x38] sm:$0xff]
  %v237 = vld [vmem:[%s4 + $0x40] sm:$0xff]
  %v238 = vld [vmem:[%s4 + $0x48] sm:$0xff]
  %v239 = vld [vmem:[%s4 + $0x50] sm:$0xff]
  %v240 = vld [vmem:[%s4 + $0x58] sm:$0xff]
  %v241 = vld [vmem:[%s4 + $0x60] sm:$0xff]
  %v242 = vld [vmem:[%s4 + $0x68] sm:$0xff]
  %v243 = vld [vmem:[%s4 + $0x70] sm:$0xff]
  %v244 = vld [vmem:[%s4 + $0x78] sm:$0xff]
  %v261 = vunpack.c.l.b16 %v229
  %v262 = vunpack.c.h.b16 %v229
  %v263 = vunpack.c.l.b16 %v230
  %v264 = vunpack.c.h.b16 %v230
  %v265 = vunpack.c.l.b16 %v231
  %v266 = vunpack.c.h.b16 %v231
  %v267 = vunpack.c.l.b16 %v232
  %v268 = vunpack.c.h.b16 %v232
  %v269 = vunpack.c.l.b16 %v233
  %v270 = vunpack.c.h.b16 %v233
  %v271 = vunpack.c.l.b16 %v234
  %v272 = vunpack.c.h.b16 %v234
  %v273 = vunpack.c.l.b16 %v235
  %v274 = vunpack.c.h.b16 %v235
  %v275 = vunpack.c.l.b16 %v236
  %v276 = vunpack.c.h.b16 %v236
  %v277 = vunpack.c.l.b16 %v237
  %v278 = vunpack.c.h.b16 %v237
  %v279 = vunpack.c.l.b16 %v238
  %v280 = vunpack.c.h.b16 %v238
  %v281 = vunpack.c.l.b16 %v239
  %v282 = vunpack.c.h.b16 %v239
  %v283 = vunpack.c.l.b16 %v240
  %v284 = vunpack.c.h.b16 %v240
  %v285 = vunpack.c.l.b16 %v241
  %v286 = vunpack.c.h.b16 %v241
  %v287 = vunpack.c.l.b16 %v242
  %v288 = vunpack.c.h.b16 %v242
  %v289 = vunpack.c.l.b16 %v243
  %v290 = vunpack.c.h.b16 %v243
  %v291 = vunpack.c.l.b16 %v244
  %v292 = vunpack.c.h.b16 %v244
  %v293 = vpack.c.b16 %v263, %v261
  %v294 = vpack.c.b16 %v264, %v262
  %v295 = vpack.c.b16 %v267, %v265
  %v296 = vpack.c.b16 %v268, %v266
  %v297 = vpack.c.b16 %v271, %v269
  %v298 = vpack.c.b16 %v272, %v270
  %v299 = vpack.c.b16 %v275, %v273
  %v300 = vpack.c.b16 %v276, %v274
  %v301 = vpack.c.b16 %v279, %v277
  %v302 = vpack.c.b16 %v280, %v278
  %v303 = vpack.c.b16 %v283, %v281
  %v304 = vpack.c.b16 %v284, %v282
  %v305 = vpack.c.b16 %v287, %v285
  %v306 = vpack.c.b16 %v288, %v286
  %v307 = vpack.c.b16 %v291, %v289
  %v308 = vpack.c.b16 %v292, %v290
  %v326 = vlaneseq
  %v327 = vshrl.u32 %v326, 7
  %v328 = vsub.s32 0, %v327
  %v329 = vrot.slane %v101, %v328
  %v330 = vlaneseq
  %v331 = vshrl.u32 %v330, 7
  %v332 = vsub.s32 1, %v331
  %v333 = vrot.slane %v101, %v332
  %336 = vmatprep.subr.bf16.mxu0 %v294
  %337 = vmatpush1.bf16.msra.mxu0 %v293
  %338 = vmatprep.subr.bf16.mxu0 %v296
  %339 = vmatpush1.bf16.msra.mxu0 %v295
  %340 = vmatprep.subr.bf16.mxu0 %v298
  %341 = vmatpush1.bf16.msra.mxu0 %v297
  %342 = vmatprep.subr.bf16.mxu0 %v300
  %343 = vmatpush1.bf16.msra.mxu0 %v299
  %344 = vmatprep.subr.bf16.mxu0 %v302
  %345 = vmatpush1.bf16.msra.mxu0 %v301
  %346 = vmatprep.subr.bf16.mxu0 %v304
  %347 = vmatpush1.bf16.msra.mxu0 %v303
  %348 = vmatprep.subr.bf16.mxu0 %v306
  %349 = vmatpush1.bf16.msra.mxu0 %v305
  %350 = vmatprep.subr.bf16.mxu0 %v308
  %351 = vmatpush1.bf16.msra.mxu0 %v307
  %352 = vmatprep.subr.bf16.mxu0 0
  %353 = vmatpush1.bf16.msra.mxu0 0
  %354 = vmatprep.subr.bf16.mxu0 0
  %355 = vmatpush1.bf16.msra.mxu0 0
  %356 = vmatprep.subr.bf16.mxu0 0
  %357 = vmatpush1.bf16.msra.mxu0 0
  %358 = vmatprep.subr.bf16.mxu0 0
  %359 = vmatpush1.bf16.msra.mxu0 0
  %360 = vmatprep.subr.bf16.mxu0 0
  %361 = vmatpush1.bf16.msra.mxu0 0
  %362 = vmatprep.subr.bf16.mxu0 0
  %363 = vmatpush1.bf16.msra.mxu0 0
  %364 = vmatprep.subr.bf16.mxu0 0
  %365 = vmatpush1.bf16.msra.mxu0 0
  %366 = vmatprep.subr.bf16.mxu0 0
  %367 = vmatpush1.bf16.msra.mxu0 0
  %368 = vmatprep.mubr.bf16.mxu0 0
  %369 = vmatmul.mubr.bf16.gmra.mrb[0].mxu0 %v228
  %v370 = vpop.f32.mrb[0].mxu0
  %v371 = vadd.f32 %v329, %v370
  %v372 = vpop.f32.mrb[0].mxu0
  %v373 = vadd.f32 %v333, %v372
  %v374 = vpop.f32.mrb[0].mxu0
  %v375 = vpop.f32.mrb[0].mxu0
  %376 = vdwg.mxu0
  %v377 = vxor.u32 %v371, 2147483648
  %v378 = vxor.u32 %v373, 2147483648
  %v379 = vmul.f32 %v377, 1.442695
  %v380 = vpow.pop %v379
  %v381 = vmul.f32 %v378, 1.442695
  %v382 = vpow.pop %v381
  %v383 = vadd.f32 %v380, 1.0
  %v384 = vadd.f32 %v382, 1.0
  %v385 = vrcp.pop %v383
  %v386 = vmul.f32 1.0, %v385
  %v387 = vrcp.pop %v384
  %v388 = vmul.f32 1.0, %v387
  %v389 = vtanh.pop %v373
  %v390 = vmul.f32 %v386, 0.0
  %392 = vrot.lane.b32.xlu0 %v389, 64
  %v393 = vpop.permute.xlu0 %392
  %v395 = vmul.f32 %v386, %v393
  %397 = vrot.lane.b32.xlu0 %v395, 64
  %v398 = vpop.permute.xlu0 %397
  %v400 = vadd.f32 %v390, %v398
  %v401 = vtanh.pop %v400
  %403 = vrot.lane.b32.xlu0 %v401, 64
  %v404 = vpop.permute.xlu0 %403
  %v406 = vmul.f32 %v388, %v404
  %v407 = vpack.c.bf16 %v226, %v226
  %v409 = vsel %vm150, %v407, 0
  %411 = vmatprep.subr.bf16.mxu0 %v135
  %412 = vmatpush1.bf16.msra.mxu0 %v134
  %413 = vmatprep.subr.bf16.mxu0 %v137
  %414 = vmatpush1.bf16.msra.mxu0 %v136
  %415 = vmatprep.subr.bf16.mxu0 %v139
  %416 = vmatpush1.bf16.msra.mxu0 %v138
  %417 = vmatprep.subr.bf16.mxu0 %v141
  %418 = vmatpush1.bf16.msra.mxu0 %v140
  %419 = vmatprep.subr.bf16.mxu0 0
  %420 = vmatpush1.bf16.msra.mxu0 0
  %421 = vmatprep.subr.bf16.mxu0 0
  %422 = vmatpush1.bf16.msra.mxu0 0
  %423 = vmatprep.subr.bf16.mxu0 0
  %424 = vmatpush1.bf16.msra.mxu0 0
  %425 = vmatprep.subr.bf16.mxu0 0
  %426 = vmatpush1.bf16.msra.mxu0 0
  %427 = vmatprep.subr.bf16.mxu0 0
  %428 = vmatpush1.bf16.msra.mxu0 0
  %429 = vmatprep.subr.bf16.mxu0 0
  %430 = vmatpush1.bf16.msra.mxu0 0
  %431 = vmatprep.subr.bf16.mxu0 0
  %432 = vmatpush1.bf16.msra.mxu0 0
  %433 = vmatprep.subr.bf16.mxu0 0
  %434 = vmatpush1.bf16.msra.mxu0 0
  %435 = vmatprep.subr.bf16.mxu0 0
  %436 = vmatpush1.bf16.msra.mxu0 0
  %437 = vmatprep.subr.bf16.mxu0 0
  %438 = vmatpush1.bf16.msra.mxu0 0
  %439 = vmatprep.subr.bf16.mxu0 0
  %440 = vmatpush1.bf16.msra.mxu0 0
  %441 = vmatprep.subr.bf16.mxu0 0
  %442 = vmatpush1.bf16.msra.mxu0 0
  %443 = vmatprep.mubr.bf16.mxu0 0
  %444 = vmatmul.mubr.bf16.gmra.mrb[0].mxu0 %v409
  %v445 = vpop.f32.mrb[0].mxu0
  %v446 = vadd.f32 0.0, %v445
  %v447 = vpop.f32.mrb[0].mxu0
  %v448 = vadd.f32 0.0, %v447
  %v449 = vpop.f32.mrb[0].mxu0
  %v450 = vpop.f32.mrb[0].mxu0
  %451 = vdwg.mxu0
  %v454 = vrot.slane %v446, 7
  %v455 = vrot.slane %v448, 7
  %v458 = vadd.f32 %v95, %v454
  %v459 = vadd.f32 %v97, %v455
  %v460 = vxor.u32 %v458, 2147483648
  %v461 = vxor.u32 %v459, 2147483648
  %v462 = vmul.f32 %v460, 1.442695
  %v463 = vpow.pop %v462
  %v464 = vmul.f32 %v461, 1.442695
  %v465 = vpow.pop %v464
  %v466 = vadd.f32 %v463, 1.0
  %v467 = vadd.f32 %v465, 1.0
  %v468 = vrcp.pop %v466
  %v469 = vmul.f32 1.0, %v468
  %v470 = vrcp.pop %v467
  %v471 = vmul.f32 1.0, %v470
  %v472 = vtanh.pop %v459
  %v474 = vrot.slane %v220, 7
  %v476 = vmul.f32 %v469, %v474
  %478 = vrot.lane.b32.xlu0 %v472, 64
  %v479 = vpop.permute.xlu0 %478
  %v481 = vmul.f32 %v469, %v479
  %483 = vrot.lane.b32.xlu0 %v481, 64
  %v484 = vpop.permute.xlu0 %483
  %v486 = vadd.f32 %v476, %v484
  %v487 = vtanh.pop %v486
  %489 = vrot.lane.b32.xlu0 %v487, 64
  %v490 = vpop.permute.xlu0 %489
  %v492 = vmul.f32 %v471, %v490
  %v494 = vrot.slane %v406, 7
  %495 = vrot.lane.b32.xlu0 %v494, 64
  %v496 = vpop.permute.xlu0 %495
  %v498 = vsel %vm150, %v492, %v496
  %v499 = vpack.c.bf16 %v498, %v498
  %v501 = vshrl.u32 %v499, 16
  %504 = vmatprep.subr.bf16.mxu0 %v294
  %505 = vmatpush1.bf16.msra.mxu0 %v293
  %506 = vmatprep.subr.bf16.mxu0 %v296
  %507 = vmatpush1.bf16.msra.mxu0 %v295
  %508 = vmatprep.subr.bf16.mxu0 %v298
  %509 = vmatpush1.bf16.msra.mxu0 %v297
  %510 = vmatprep.subr.bf16.mxu0 %v300
  %511 = vmatpush1.bf16.msra.mxu0 %v299
  %512 = vmatprep.subr.bf16.mxu0 %v302
  %513 = vmatpush1.bf16.msra.mxu0 %v301
  %514 = vmatprep.subr.bf16.mxu0 %v304
  %515 = vmatpush1.bf16.msra.mxu0 %v303
  %516 = vmatprep.subr.bf16.mxu0 %v306
  %517 = vmatpush1.bf16.msra.mxu0 %v305
  %518 = vmatprep.subr.bf16.mxu0 %v308
  %519 = vmatpush1.bf16.msra.mxu0 %v307
  %520 = vmatprep.subr.bf16.mxu0 0
  %521 = vmatpush1.bf16.msra.mxu0 0
  %522 = vmatprep.subr.bf16.mxu0 0
  %523 = vmatpush1.bf16.msra.mxu0 0
  %524 = vmatprep.subr.bf16.mxu0 0
  %525 = vmatpush1.bf16.msra.mxu0 0
  %526 = vmatprep.subr.bf16.mxu0 0
  %527 = vmatpush1.bf16.msra.mxu0 0
  %528 = vmatprep.subr.bf16.mxu0 0
  %529 = vmatpush1.bf16.msra.mxu0 0
  %530 = vmatprep.subr.bf16.mxu0 0
  %531 = vmatpush1.bf16.msra.mxu0 0
  %532 = vmatprep.subr.bf16.mxu0 0
  %533 = vmatpush1.bf16.msra.mxu0 0
  %534 = vmatprep.subr.bf16.mxu0 0
  %535 = vmatpush1.bf16.msra.mxu0 0
  %536 = vmatprep.mubr.bf16.mxu0 0
  %537 = vmatmul.mubr.bf16.gmra.mrb[0].mxu0 %v501
  %v538 = vpop.f32.mrb[0].mxu0
  %v539 = vadd.f32 %v329, %v538
  %v540 = vpop.f32.mrb[0].mxu0
  %v541 = vadd.f32 %v333, %v540
  %v542 = vpop.f32.mrb[0].mxu0
  %v543 = vpop.f32.mrb[0].mxu0
  %544 = vdwg.mxu0
  %v545 = vxor.u32 %v539, 2147483648
  %v546 = vxor.u32 %v541, 2147483648
  %v547 = vmul.f32 %v545, 1.442695
  %v548 = vpow.pop %v547
  %v549 = vmul.f32 %v546, 1.442695
  %v550 = vpow.pop %v549
  %v551 = vadd.f32 %v548, 1.0
  %v552 = vadd.f32 %v550, 1.0
  %v553 = vrcp.pop %v551
  %v554 = vmul.f32 1.0, %v553
  %v555 = vrcp.pop %v552
  %v556 = vmul.f32 1.0, %v555
  %v557 = vtanh.pop %v541
  %v558 = vmul.f32 %v554, %v400
  %560 = vrot.lane.b32.xlu0 %v557, 64
  %v561 = vpop.permute.xlu0 %560
  %v563 = vmul.f32 %v554, %v561
  %565 = vrot.lane.b32.xlu0 %v563, 64
  %v566 = vpop.permute.xlu0 %565
  %v568 = vadd.f32 %v558, %v566
  %v569 = vtanh.pop %v568
  %571 = vrot.lane.b32.xlu0 %v569, 64
  %v572 = vpop.permute.xlu0 %571
  %v574 = vmul.f32 %v556, %v572
  %v575 = vpack.c.bf16 %v492, %v492
  %v577 = vshrl.u32 %v575, 16
  %v580 = vsel %vm150, %v577, 0
  %582 = vmatprep.subr.bf16.mxu0 %v135
  %583 = vmatpush1.bf16.msra.mxu0 %v134
  %584 = vmatprep.subr.bf16.mxu0 %v137
  %585 = vmatpush1.bf16.msra.mxu0 %v136
  %586 = vmatprep.subr.bf16.mxu0 %v139
  %587 = vmatpush1.bf16.msra.mxu0 %v138
  %588 = vmatprep.subr.bf16.mxu0 %v141
  %589 = vmatpush1.bf16.msra.mxu0 %v140
  %590 = vmatprep.subr.bf16.mxu0 0
  %591 = vmatpush1.bf16.msra.mxu0 0
  %592 = vmatprep.subr.bf16.mxu0 0
  %593 = vmatpush1.bf16.msra.mxu0 0
  %594 = vmatprep.subr.bf16.mxu0 0
  %595 = vmatpush1.bf16.msra.mxu0 0
  %596 = vmatprep.subr.bf16.mxu0 0
  %597 = vmatpush1.bf16.msra.mxu0 0
  %598 = vmatprep.subr.bf16.mxu0 0
  %599 = vmatpush1.bf16.msra.mxu0 0
  %600 = vmatprep.subr.bf16.mxu0 0
  %601 = vmatpush1.bf16.msra.mxu0 0
  %602 = vmatprep.subr.bf16.mxu0 0
  %603 = vmatpush1.bf16.msra.mxu0 0
  %604 = vmatprep.subr.bf16.mxu0 0
  %605 = vmatpush1.bf16.msra.mxu0 0
  %606 = vmatprep.subr.bf16.mxu0 0
  %607 = vmatpush1.bf16.msra.mxu0 0
  %608 = vmatprep.subr.bf16.mxu0 0
  %609 = vmatpush1.bf16.msra.mxu0 0
  %610 = vmatprep.subr.bf16.mxu0 0
  %611 = vmatpush1.bf16.msra.mxu0 0
  %612 = vmatprep.subr.bf16.mxu0 0
  %613 = vmatpush1.bf16.msra.mxu0 0
  %614 = vmatprep.mubr.bf16.mxu0 0
  %615 = vmatmul.mubr.bf16.gmra.mrb[0].mxu0 %v580
  %v616 = vpop.f32.mrb[0].mxu0
  %v617 = vadd.f32 0.0, %v616
  %v618 = vpop.f32.mrb[0].mxu0
  %v619 = vadd.f32 0.0, %v618
  %v620 = vpop.f32.mrb[0].mxu0
  %v621 = vpop.f32.mrb[0].mxu0
  %622 = vdwg.mxu0
  %v625 = vrot.slane %v617, 6
  %v626 = vrot.slane %v619, 6
  %v629 = vadd.f32 %v95, %v625
  %v630 = vadd.f32 %v97, %v626
  %v631 = vxor.u32 %v629, 2147483648
  %v632 = vxor.u32 %v630, 2147483648
  %v633 = vmul.f32 %v631, 1.442695
  %v634 = vpow.pop %v633
  %v635 = vmul.f32 %v632, 1.442695
  %v636 = vpow.pop %v635
  %v637 = vadd.f32 %v634, 1.0
  %v638 = vadd.f32 %v636, 1.0
  %v639 = vrcp.pop %v637
  %v640 = vmul.f32 1.0, %v639
  %v641 = vrcp.pop %v638
  %v642 = vmul.f32 1.0, %v641
  %v643 = vtanh.pop %v630
  %v645 = vrot.slane %v486, 7
  %v647 = vmul.f32 %v640, %v645
  %649 = vrot.lane.b32.xlu0 %v643, 64
  %v650 = vpop.permute.xlu0 %649
  %v652 = vmul.f32 %v640, %v650
  %654 = vrot.lane.b32.xlu0 %v652, 64
  %v655 = vpop.permute.xlu0 %654
  %v657 = vadd.f32 %v647, %v655
  %v658 = vtanh.pop %v657
  %660 = vrot.lane.b32.xlu0 %v658, 64
  %v661 = vpop.permute.xlu0 %660
  %v663 = vmul.f32 %v642, %v661
  %v665 = vrot.slane %v574, 6
  %666 = vrot.lane.b32.xlu0 %v665, 64
  %v667 = vpop.permute.xlu0 %666
  %v669 = vsel %vm150, %v663, %v667
  %v670 = vpack.c.bf16 %v669, %v669
  %v672 = vrot.slane %v670, 1
  %674 = vmatprep.subr.bf16.mxu0 %v294
  %675 = vmatpush1.bf16.msra.mxu0 %v293
  %676 = vmatprep.subr.bf16.mxu0 %v296
  %677 = vmatpush1.bf16.msra.mxu0 %v295
  %678 = vmatprep.subr.bf16.mxu0 %v298
  %679 = vmatpush1.bf16.msra.mxu0 %v297
  %680 = vmatprep.subr.bf16.mxu0 %v300
  %681 = vmatpush1.bf16.msra.mxu0 %v299
  %682 = vmatprep.subr.bf16.mxu0 %v302
  %683 = vmatpush1.bf16.msra.mxu0 %v301
  %684 = vmatprep.subr.bf16.mxu0 %v304
  %685 = vmatpush1.bf16.msra.mxu0 %v303
  %686 = vmatprep.subr.bf16.mxu0 %v306
  %687 = vmatpush1.bf16.msra.mxu0 %v305
  %688 = vmatprep.subr.bf16.mxu0 %v308
  %689 = vmatpush1.bf16.msra.mxu0 %v307
  %690 = vmatprep.subr.bf16.mxu0 0
  %691 = vmatpush1.bf16.msra.mxu0 0
  %692 = vmatprep.subr.bf16.mxu0 0
  %693 = vmatpush1.bf16.msra.mxu0 0
  %694 = vmatprep.subr.bf16.mxu0 0
  %695 = vmatpush1.bf16.msra.mxu0 0
  %696 = vmatprep.subr.bf16.mxu0 0
  %697 = vmatpush1.bf16.msra.mxu0 0
  %698 = vmatprep.subr.bf16.mxu0 0
  %699 = vmatpush1.bf16.msra.mxu0 0
  %700 = vmatprep.subr.bf16.mxu0 0
  %701 = vmatpush1.bf16.msra.mxu0 0
  %702 = vmatprep.subr.bf16.mxu0 0
  %703 = vmatpush1.bf16.msra.mxu0 0
  %704 = vmatprep.subr.bf16.mxu0 0
  %705 = vmatpush1.bf16.msra.mxu0 0
  %706 = vmatprep.mubr.bf16.mxu0 0
  %707 = vmatmul.mubr.bf16.gmra.mrb[0].mxu0 %v672
  %v708 = vpop.f32.mrb[0].mxu0
  %v709 = vadd.f32 %v329, %v708
  %v710 = vpop.f32.mrb[0].mxu0
  %v711 = vadd.f32 %v333, %v710
  %v712 = vpop.f32.mrb[0].mxu0
  %v713 = vpop.f32.mrb[0].mxu0
  %714 = vdwg.mxu0
  %v715 = vxor.u32 %v709, 2147483648
  %v716 = vxor.u32 %v711, 2147483648
  %v717 = vmul.f32 %v715, 1.442695
  %v718 = vpow.pop %v717
  %v719 = vmul.f32 %v716, 1.442695
  %v720 = vpow.pop %v719
  %v721 = vadd.f32 %v718, 1.0
  %v722 = vadd.f32 %v720, 1.0
  %v723 = vrcp.pop %v721
  %v724 = vmul.f32 1.0, %v723
  %v725 = vrcp.pop %v722
  %v726 = vmul.f32 1.0, %v725
  %v727 = vtanh.pop %v711
  %v728 = vmul.f32 %v724, %v568
  %730 = vrot.lane.b32.xlu0 %v727, 64
  %v731 = vpop.permute.xlu0 %730
  %v733 = vmul.f32 %v724, %v731
  %735 = vrot.lane.b32.xlu0 %v733, 64
  %v736 = vpop.permute.xlu0 %735
  %v738 = vadd.f32 %v728, %v736
  %v739 = vtanh.pop %v738
  %741 = vrot.lane.b32.xlu0 %v739, 64
  %v742 = vpop.permute.xlu0 %741
  %v744 = vmul.f32 %v726, %v742
  %v745 = vpack.c.bf16 %v663, %v663
  %v747 = vrot.slane %v745, 1
  %v749 = vsel %vm150, %v747, 0
  %751 = vmatprep.subr.bf16.mxu0 %v135
  %752 = vmatpush1.bf16.msra.mxu0 %v134
  %753 = vmatprep.subr.bf16.mxu0 %v137
  %754 = vmatpush1.bf16.msra.mxu0 %v136
  %755 = vmatprep.subr.bf16.mxu0 %v139
  %756 = vmatpush1.bf16.msra.mxu0 %v138
  %757 = vmatprep.subr.bf16.mxu0 %v141
  %758 = vmatpush1.bf16.msra.mxu0 %v140
  %759 = vmatprep.subr.bf16.mxu0 0
  %760 = vmatpush1.bf16.msra.mxu0 0
  %761 = vmatprep.subr.bf16.mxu0 0
  %762 = vmatpush1.bf16.msra.mxu0 0
  %763 = vmatprep.subr.bf16.mxu0 0
  %764 = vmatpush1.bf16.msra.mxu0 0
  %765 = vmatprep.subr.bf16.mxu0 0
  %766 = vmatpush1.bf16.msra.mxu0 0
  %767 = vmatprep.subr.bf16.mxu0 0
  %768 = vmatpush1.bf16.msra.mxu0 0
  %769 = vmatprep.subr.bf16.mxu0 0
  %770 = vmatpush1.bf16.msra.mxu0 0
  %771 = vmatprep.subr.bf16.mxu0 0
  %772 = vmatpush1.bf16.msra.mxu0 0
  %773 = vmatprep.subr.bf16.mxu0 0
  %774 = vmatpush1.bf16.msra.mxu0 0
  %775 = vmatprep.subr.bf16.mxu0 0
  %776 = vmatpush1.bf16.msra.mxu0 0
  %777 = vmatprep.subr.bf16.mxu0 0
  %778 = vmatpush1.bf16.msra.mxu0 0
  %779 = vmatprep.subr.bf16.mxu0 0
  %780 = vmatpush1.bf16.msra.mxu0 0
  %781 = vmatprep.subr.bf16.mxu0 0
  %782 = vmatpush1.bf16.msra.mxu0 0
  %783 = vmatprep.mubr.bf16.mxu0 0
  %784 = vmatmul.mubr.bf16.gmra.mrb[0].mxu0 %v749
  %v785 = vpop.f32.mrb[0].mxu0
  %v786 = vadd.f32 0.0, %v785
  %v787 = vpop.f32.mrb[0].mxu0
  %v788 = vadd.f32 0.0, %v787
  %v789 = vpop.f32.mrb[0].mxu0
  %v790 = vpop.f32.mrb[0].mxu0
  %791 = vdwg.mxu0
  %v794 = vrot.slane %v786, 5
  %v795 = vrot.slane %v788, 5
  %v798 = vadd.f32 %v95, %v794
  %v799 = vadd.f32 %v97, %v795
  %v800 = vxor.u32 %v798, 2147483648
  %v801 = vxor.u32 %v799, 2147483648
  %v802 = vmul.f32 %v800, 1.442695
  %v803 = vpow.pop %v802
  %v804 = vmul.f32 %v801, 1.442695
  %v805 = vpow.pop %v804
  %v806 = vadd.f32 %v803, 1.0
  %v807 = vadd.f32 %v805, 1.0
  %v808 = vrcp.pop %v806
  %v809 = vmul.f32 1.0, %v808
  %v810 = vrcp.pop %v807
  %v811 = vmul.f32 1.0, %v810
  %v812 = vtanh.pop %v799
  %v814 = vrot.slane %v657, 7
  %v816 = vmul.f32 %v809, %v814
  %818 = vrot.lane.b32.xlu0 %v812, 64
  %v819 = vpop.permute.xlu0 %818
  %v821 = vmul.f32 %v809, %v819
  %823 = vrot.lane.b32.xlu0 %v821, 64
  %v824 = vpop.permute.xlu0 %823
  %v826 = vadd.f32 %v816, %v824
  %v827 = vtanh.pop %v826
  %829 = vrot.lane.b32.xlu0 %v827, 64
  %v830 = vpop.permute.xlu0 %829
  %v832 = vmul.f32 %v811, %v830
  %v834 = vrot.slane %v744, 5
  %835 = vrot.lane.b32.xlu0 %v834, 64
  %v836 = vpop.permute.xlu0 %835
  %v838 = vsel %vm150, %v832, %v836
  %v839 = vpack.c.bf16 %v838, %v838
  %v841 = vshrl.u32 %v839, 16
  %v843 = vrot.slane %v841, 1
  %845 = vmatprep.subr.bf16.mxu0 %v294
  %846 = vmatpush1.bf16.msra.mxu0 %v293
  %847 = vmatprep.subr.bf16.mxu0 %v296
  %848 = vmatpush1.bf16.msra.mxu0 %v295
  %849 = vmatprep.subr.bf16.mxu0 %v298
  %850 = vmatpush1.bf16.msra.mxu0 %v297
  %851 = vmatprep.subr.bf16.mxu0 %v300
  %852 = vmatpush1.bf16.msra.mxu0 %v299
  %853 = vmatprep.subr.bf16.mxu0 %v302
  %854 = vmatpush1.bf16.msra.mxu0 %v301
  %855 = vmatprep.subr.bf16.mxu0 %v304
  %856 = vmatpush1.bf16.msra.mxu0 %v303
  %857 = vmatprep.subr.bf16.mxu0 %v306
  %858 = vmatpush1.bf16.msra.mxu0 %v305
  %859 = vmatprep.subr.bf16.mxu0 %v308
  %860 = vmatpush1.bf16.msra.mxu0 %v307
  %861 = vmatprep.subr.bf16.mxu0 0
  %862 = vmatpush1.bf16.msra.mxu0 0
  %863 = vmatprep.subr.bf16.mxu0 0
  %864 = vmatpush1.bf16.msra.mxu0 0
  %865 = vmatprep.subr.bf16.mxu0 0
  %866 = vmatpush1.bf16.msra.mxu0 0
  %867 = vmatprep.subr.bf16.mxu0 0
  %868 = vmatpush1.bf16.msra.mxu0 0
  %869 = vmatprep.subr.bf16.mxu0 0
  %870 = vmatpush1.bf16.msra.mxu0 0
  %871 = vmatprep.subr.bf16.mxu0 0
  %872 = vmatpush1.bf16.msra.mxu0 0
  %873 = vmatprep.subr.bf16.mxu0 0
  %874 = vmatpush1.bf16.msra.mxu0 0
  %875 = vmatprep.subr.bf16.mxu0 0
  %876 = vmatpush1.bf16.msra.mxu0 0
  %877 = vmatprep.mubr.bf16.mxu0 0
  %878 = vmatmul.mubr.bf16.gmra.mrb[0].mxu0 %v843
  %v879 = vpop.f32.mrb[0].mxu0
  %v880 = vadd.f32 %v329, %v879
  %v881 = vpop.f32.mrb[0].mxu0
  %v882 = vadd.f32 %v333, %v881
  %v883 = vpop.f32.mrb[0].mxu0
  %v884 = vpop.f32.mrb[0].mxu0
  %885 = vdwg.mxu0
  %v886 = vxor.u32 %v880, 2147483648
  %v887 = vxor.u32 %v882, 2147483648
  %v888 = vmul.f32 %v886, 1.442695
  %v889 = vpow.pop %v888
  %v890 = vmul.f32 %v887, 1.442695
  %v891 = vpow.pop %v890
  %v892 = vadd.f32 %v889, 1.0
  %v893 = vadd.f32 %v891, 1.0
  %v894 = vrcp.pop %v892
  %v895 = vmul.f32 1.0, %v894
  %v896 = vrcp.pop %v893
  %v897 = vmul.f32 1.0, %v896
  %v898 = vtanh.pop %v882
  %v899 = vmul.f32 %v895, %v738
  %901 = vrot.lane.b32.xlu0 %v898, 64
  %v902 = vpop.permute.xlu0 %901
  %v904 = vmul.f32 %v895, %v902
  %906 = vrot.lane.b32.xlu0 %v904, 64
  %v907 = vpop.permute.xlu0 %906
  %v909 = vadd.f32 %v899, %v907
  %v910 = vtanh.pop %v909
  %912 = vrot.lane.b32.xlu0 %v910, 64
  %v913 = vpop.permute.xlu0 %912
  %v915 = vmul.f32 %v897, %v913
  %v916 = vpack.c.bf16 %v832, %v832
  %v918 = vshrl.u32 %v916, 16
  %v920 = vrot.slane %v918, 1
  %v922 = vsel %vm150, %v920, 0
  %924 = vmatprep.subr.bf16.mxu0 %v135
  %925 = vmatpush1.bf16.msra.mxu0 %v134
  %926 = vmatprep.subr.bf16.mxu0 %v137
  %927 = vmatpush1.bf16.msra.mxu0 %v136
  %928 = vmatprep.subr.bf16.mxu0 %v139
  %929 = vmatpush1.bf16.msra.mxu0 %v138
  %930 = vmatprep.subr.bf16.mxu0 %v141
  %931 = vmatpush1.bf16.msra.mxu0 %v140
  %932 = vmatprep.subr.bf16.mxu0 0
  %933 = vmatpush1.bf16.msra.mxu0 0
  %934 = vmatprep.subr.bf16.mxu0 0
  %935 = vmatpush1.bf16.msra.mxu0 0
  %936 = vmatprep.subr.bf16.mxu0 0
  %937 = vmatpush1.bf16.msra.mxu0 0
  %938 = vmatprep.subr.bf16.mxu0 0
  %939 = vmatpush1.bf16.msra.mxu0 0
  %940 = vmatprep.subr.bf16.mxu0 0
  %941 = vmatpush1.bf16.msra.mxu0 0
  %942 = vmatprep.subr.bf16.mxu0 0
  %943 = vmatpush1.bf16.msra.mxu0 0
  %944 = vmatprep.subr.bf16.mxu0 0
  %945 = vmatpush1.bf16.msra.mxu0 0
  %946 = vmatprep.subr.bf16.mxu0 0
  %947 = vmatpush1.bf16.msra.mxu0 0
  %948 = vmatprep.subr.bf16.mxu0 0
  %949 = vmatpush1.bf16.msra.mxu0 0
  %950 = vmatprep.subr.bf16.mxu0 0
  %951 = vmatpush1.bf16.msra.mxu0 0
  %952 = vmatprep.subr.bf16.mxu0 0
  %953 = vmatpush1.bf16.msra.mxu0 0
  %954 = vmatprep.subr.bf16.mxu0 0
  %955 = vmatpush1.bf16.msra.mxu0 0
  %956 = vmatprep.mubr.bf16.mxu0 0
  %957 = vmatmul.mubr.bf16.gmra.mrb[0].mxu0 %v922
  %v958 = vpop.f32.mrb[0].mxu0
  %v959 = vadd.f32 0.0, %v958
  %v960 = vpop.f32.mrb[0].mxu0
  %v961 = vadd.f32 0.0, %v960
  %v962 = vpop.f32.mrb[0].mxu0
  %v963 = vpop.f32.mrb[0].mxu0
  %964 = vdwg.mxu0
  %v967 = vrot.slane %v959, 4
  %v968 = vrot.slane %v961, 4
  %v971 = vadd.f32 %v95, %v967
  %v972 = vadd.f32 %v97, %v968
  %v973 = vxor.u32 %v971, 2147483648
  %v974 = vxor.u32 %v972, 2147483648
  %v975 = vmul.f32 %v973, 1.442695
  %v976 = vpow.pop %v975
  %v977 = vmul.f32 %v974, 1.442695
  %v978 = vpow.pop %v977
  %v979 = vadd.f32 %v976, 1.0
  %v980 = vadd.f32 %v978, 1.0
  %v981 = vrcp.pop %v979
  %v982 = vmul.f32 1.0, %v981
  %v983 = vrcp.pop %v980
  %v984 = vmul.f32 1.0, %v983
  %v985 = vtanh.pop %v972
  %v987 = vrot.slane %v826, 7
  %v989 = vmul.f32 %v982, %v987
  %991 = vrot.lane.b32.xlu0 %v985, 64
  %v992 = vpop.permute.xlu0 %991
  %v994 = vmul.f32 %v982, %v992
  %996 = vrot.lane.b32.xlu0 %v994, 64
  %v997 = vpop.permute.xlu0 %996
  %v999 = vadd.f32 %v989, %v997
  %v1000 = vtanh.pop %v999
  %1002 = vrot.lane.b32.xlu0 %v1000, 64
  %v1003 = vpop.permute.xlu0 %1002
  %v1005 = vmul.f32 %v984, %v1003
  %v1007 = vrot.slane %v915, 4
  %1008 = vrot.lane.b32.xlu0 %v1007, 64
  %v1009 = vpop.permute.xlu0 %1008
  %v1011 = vsel %vm150, %v1005, %v1009
  %v1012 = vpack.c.bf16 %v1011, %v1011
  %v1014 = vrot.slane %v1012, 2
  %1016 = vmatprep.subr.bf16.mxu0 %v294
  %1017 = vmatpush1.bf16.msra.mxu0 %v293
  %1018 = vmatprep.subr.bf16.mxu0 %v296
  %1019 = vmatpush1.bf16.msra.mxu0 %v295
  %1020 = vmatprep.subr.bf16.mxu0 %v298
  %1021 = vmatpush1.bf16.msra.mxu0 %v297
  %1022 = vmatprep.subr.bf16.mxu0 %v300
  %1023 = vmatpush1.bf16.msra.mxu0 %v299
  %1024 = vmatprep.subr.bf16.mxu0 %v302
  %1025 = vmatpush1.bf16.msra.mxu0 %v301
  %1026 = vmatprep.subr.bf16.mxu0 %v304
  %1027 = vmatpush1.bf16.msra.mxu0 %v303
  %1028 = vmatprep.subr.bf16.mxu0 %v306
  %1029 = vmatpush1.bf16.msra.mxu0 %v305
  %1030 = vmatprep.subr.bf16.mxu0 %v308
  %1031 = vmatpush1.bf16.msra.mxu0 %v307
  %1032 = vmatprep.subr.bf16.mxu0 0
  %1033 = vmatpush1.bf16.msra.mxu0 0
  %1034 = vmatprep.subr.bf16.mxu0 0
  %1035 = vmatpush1.bf16.msra.mxu0 0
  %1036 = vmatprep.subr.bf16.mxu0 0
  %1037 = vmatpush1.bf16.msra.mxu0 0
  %1038 = vmatprep.subr.bf16.mxu0 0
  %1039 = vmatpush1.bf16.msra.mxu0 0
  %1040 = vmatprep.subr.bf16.mxu0 0
  %1041 = vmatpush1.bf16.msra.mxu0 0
  %1042 = vmatprep.subr.bf16.mxu0 0
  %1043 = vmatpush1.bf16.msra.mxu0 0
  %1044 = vmatprep.subr.bf16.mxu0 0
  %1045 = vmatpush1.bf16.msra.mxu0 0
  %1046 = vmatprep.subr.bf16.mxu0 0
  %1047 = vmatpush1.bf16.msra.mxu0 0
  %1048 = vmatprep.mubr.bf16.mxu0 0
  %1049 = vmatmul.mubr.bf16.gmra.mrb[0].mxu0 %v1014
  %v1050 = vpop.f32.mrb[0].mxu0
  %v1051 = vadd.f32 %v329, %v1050
  %v1052 = vpop.f32.mrb[0].mxu0
  %v1053 = vadd.f32 %v333, %v1052
  %v1054 = vpop.f32.mrb[0].mxu0
  %v1055 = vpop.f32.mrb[0].mxu0
  %1056 = vdwg.mxu0
  %v1057 = vxor.u32 %v1051, 2147483648
  %v1058 = vxor.u32 %v1053, 2147483648
  %v1059 = vmul.f32 %v1057, 1.442695
  %v1060 = vpow.pop %v1059
  %v1061 = vmul.f32 %v1058, 1.442695
  %v1062 = vpow.pop %v1061
  %v1063 = vadd.f32 %v1060, 1.0
  %v1064 = vadd.f32 %v1062, 1.0
  %v1065 = vrcp.pop %v1063
  %v1066 = vmul.f32 1.0, %v1065
  %v1067 = vrcp.pop %v1064
  %v1068 = vmul.f32 1.0, %v1067
  %v1069 = vtanh.pop %v1053
  %v1070 = vmul.f32 %v1066, %v909
  %1072 = vrot.lane.b32.xlu0 %v1069, 64
  %v1073 = vpop.permute.xlu0 %1072
  %v1075 = vmul.f32 %v1066, %v1073
  %1077 = vrot.lane.b32.xlu0 %v1075, 64
  %v1078 = vpop.permute.xlu0 %1077
  %v1080 = vadd.f32 %v1070, %v1078
  %v1081 = vtanh.pop %v1080
  %1083 = vrot.lane.b32.xlu0 %v1081, 64
  %v1084 = vpop.permute.xlu0 %1083
  %v1086 = vmul.f32 %v1068, %v1084
  %v1087 = vpack.c.bf16 %v1005, %v1005
  %v1089 = vrot.slane %v1087, 2
  %v1091 = vsel %vm150, %v1089, 0
  %1093 = vmatprep.subr.bf16.mxu0 %v135
  %1094 = vmatpush1.bf16.msra.mxu0 %v134
  %1095 = vmatprep.subr.bf16.mxu0 %v137
  %1096 = vmatpush1.bf16.msra.mxu0 %v136
  %1097 = vmatprep.subr.bf16.mxu0 %v139
  %1098 = vmatpush1.bf16.msra.mxu0 %v138
  %1099 = vmatprep.subr.bf16.mxu0 %v141
  %1100 = vmatpush1.bf16.msra.mxu0 %v140
  %1101 = vmatprep.subr.bf16.mxu0 0
  %1102 = vmatpush1.bf16.msra.mxu0 0
  %1103 = vmatprep.subr.bf16.mxu0 0
  %1104 = vmatpush1.bf16.msra.mxu0 0
  %1105 = vmatprep.subr.bf16.mxu0 0
  %1106 = vmatpush1.bf16.msra.mxu0 0
  %1107 = vmatprep.subr.bf16.mxu0 0
  %1108 = vmatpush1.bf16.msra.mxu0 0
  %1109 = vmatprep.subr.bf16.mxu0 0
  %1110 = vmatpush1.bf16.msra.mxu0 0
  %1111 = vmatprep.subr.bf16.mxu0 0
  %1112 = vmatpush1.bf16.msra.mxu0 0
  %1113 = vmatprep.subr.bf16.mxu0 0
  %1114 = vmatpush1.bf16.msra.mxu0 0
  %1115 = vmatprep.subr.bf16.mxu0 0
  %1116 = vmatpush1.bf16.msra.mxu0 0
  %1117 = vmatprep.subr.bf16.mxu0 0
  %1118 = vmatpush1.bf16.msra.mxu0 0
  %1119 = vmatprep.subr.bf16.mxu0 0
  %1120 = vmatpush1.bf16.msra.mxu0 0
  %1121 = vmatprep.subr.bf16.mxu0 0
  %1122 = vmatpush1.bf16.msra.mxu0 0
  %1123 = vmatprep.subr.bf16.mxu0 0
  %1124 = vmatpush1.bf16.msra.mxu0 0
  %1125 = vmatprep.mubr.bf16.mxu0 0
  %1126 = vmatmul.mubr.bf16.gmra.mrb[0].mxu0 %v1091
  %v1127 = vpop.f32.mrb[0].mxu0
  %v1128 = vadd.f32 0.0, %v1127
  %v1129 = vpop.f32.mrb[0].mxu0
  %v1130 = vadd.f32 0.0, %v1129
  %v1131 = vpop.f32.mrb[0].mxu0
  %v1132 = vpop.f32.mrb[0].mxu0
  %1133 = vdwg.mxu0
  %v1136 = vrot.slane %v1128, 3
  %v1137 = vrot.slane %v1130, 3
  %v1140 = vadd.f32 %v95, %v1136
  %v1141 = vadd.f32 %v97, %v1137
  %v1142 = vxor.u32 %v1140, 2147483648
  %v1143 = vxor.u32 %v1141, 2147483648
  %v1144 = vmul.f32 %v1142, 1.442695
  %v1145 = vpow.pop %v1144
  %v1146 = vmul.f32 %v1143, 1.442695
  %v1147 = vpow.pop %v1146
  %v1148 = vadd.f32 %v1145, 1.0
  %v1149 = vadd.f32 %v1147, 1.0
  %v1150 = vrcp.pop %v1148
  %v1151 = vmul.f32 1.0, %v1150
  %v1152 = vrcp.pop %v1149
  %v1153 = vmul.f32 1.0, %v1152
  %v1154 = vtanh.pop %v1141
  %v1156 = vrot.slane %v999, 7
  %v1158 = vmul.f32 %v1151, %v1156
  %1160 = vrot.lane.b32.xlu0 %v1154, 64
  %v1161 = vpop.permute.xlu0 %1160
  %v1163 = vmul.f32 %v1151, %v1161
  %1165 = vrot.lane.b32.xlu0 %v1163, 64
  %v1166 = vpop.permute.xlu0 %1165
  %v1168 = vadd.f32 %v1158, %v1166
  %v1169 = vtanh.pop %v1168
  %1171 = vrot.lane.b32.xlu0 %v1169, 64
  %v1172 = vpop.permute.xlu0 %1171
  %v1174 = vmul.f32 %v1153, %v1172
  %v1176 = vrot.slane %v1086, 3
  %1177 = vrot.lane.b32.xlu0 %v1176, 64
  %v1178 = vpop.permute.xlu0 %1177
  %v1180 = vsel %vm150, %v1174, %v1178
  %v1181 = vpack.c.bf16 %v1180, %v1180
  %v1183 = vshrl.u32 %v1181, 16
  %v1185 = vrot.slane %v1183, 2
  %1187 = vmatprep.subr.bf16.mxu0 %v294
  %1188 = vmatpush1.bf16.msra.mxu0 %v293
  %1189 = vmatprep.subr.bf16.mxu0 %v296
  %1190 = vmatpush1.bf16.msra.mxu0 %v295
  %1191 = vmatprep.subr.bf16.mxu0 %v298
  %1192 = vmatpush1.bf16.msra.mxu0 %v297
  %1193 = vmatprep.subr.bf16.mxu0 %v300
  %1194 = vmatpush1.bf16.msra.mxu0 %v299
  %1195 = vmatprep.subr.bf16.mxu0 %v302
  %1196 = vmatpush1.bf16.msra.mxu0 %v301
  %1197 = vmatprep.subr.bf16.mxu0 %v304
  %1198 = vmatpush1.bf16.msra.mxu0 %v303
  %1199 = vmatprep.subr.bf16.mxu0 %v306
  %1200 = vmatpush1.bf16.msra.mxu0 %v305
  %1201 = vmatprep.subr.bf16.mxu0 %v308
  %1202 = vmatpush1.bf16.msra.mxu0 %v307
  %1203 = vmatprep.subr.bf16.mxu0 0
  %1204 = vmatpush1.bf16.msra.mxu0 0
  %1205 = vmatprep.subr.bf16.mxu0 0
  %1206 = vmatpush1.bf16.msra.mxu0 0
  %1207 = vmatprep.subr.bf16.mxu0 0
  %1208 = vmatpush1.bf16.msra.mxu0 0
  %1209 = vmatprep.subr.bf16.mxu0 0
  %1210 = vmatpush1.bf16.msra.mxu0 0
  %1211 = vmatprep.subr.bf16.mxu0 0
  %1212 = vmatpush1.bf16.msra.mxu0 0
  %1213 = vmatprep.subr.bf16.mxu0 0
  %1214 = vmatpush1.bf16.msra.mxu0 0
  %1215 = vmatprep.subr.bf16.mxu0 0
  %1216 = vmatpush1.bf16.msra.mxu0 0
  %1217 = vmatprep.subr.bf16.mxu0 0
  %1218 = vmatpush1.bf16.msra.mxu0 0
  %1219 = vmatprep.mubr.bf16.mxu0 0
  %1220 = vmatmul.mubr.bf16.gmra.mrb[0].mxu0 %v1185
  %v1221 = vpop.f32.mrb[0].mxu0
  %v1222 = vadd.f32 %v329, %v1221
  %v1223 = vpop.f32.mrb[0].mxu0
  %v1224 = vadd.f32 %v333, %v1223
  %v1225 = vpop.f32.mrb[0].mxu0
  %v1226 = vpop.f32.mrb[0].mxu0
  %1227 = vdwg.mxu0
  %v1228 = vxor.u32 %v1222, 2147483648
  %v1229 = vxor.u32 %v1224, 2147483648
  %v1230 = vmul.f32 %v1228, 1.442695
  %v1231 = vpow.pop %v1230
  %v1232 = vmul.f32 %v1229, 1.442695
  %v1233 = vpow.pop %v1232
  %v1234 = vadd.f32 %v1231, 1.0
  %v1235 = vadd.f32 %v1233, 1.0
  %v1236 = vrcp.pop %v1234
  %v1237 = vmul.f32 1.0, %v1236
  %v1238 = vrcp.pop %v1235
  %v1239 = vmul.f32 1.0, %v1238
  %v1240 = vtanh.pop %v1224
  %v1241 = vmul.f32 %v1237, %v1080
  %1243 = vrot.lane.b32.xlu0 %v1240, 64
  %v1244 = vpop.permute.xlu0 %1243
  %v1246 = vmul.f32 %v1237, %v1244
  %1248 = vrot.lane.b32.xlu0 %v1246, 64
  %v1249 = vpop.permute.xlu0 %1248
  %v1251 = vadd.f32 %v1241, %v1249
  %v1252 = vtanh.pop %v1251
  %1254 = vrot.lane.b32.xlu0 %v1252, 64
  %v1255 = vpop.permute.xlu0 %1254
  %v1257 = vmul.f32 %v1239, %v1255
  %v1258 = vpack.c.bf16 %v1174, %v1174
  %v1260 = vshrl.u32 %v1258, 16
  %v1262 = vrot.slane %v1260, 2
  %v1264 = vsel %vm150, %v1262, 0
  %1266 = vmatprep.subr.bf16.mxu0 %v135
  %1267 = vmatpush1.bf16.msra.mxu0 %v134
  %1268 = vmatprep.subr.bf16.mxu0 %v137
  %1269 = vmatpush1.bf16.msra.mxu0 %v136
  %1270 = vmatprep.subr.bf16.mxu0 %v139
  %1271 = vmatpush1.bf16.msra.mxu0 %v138
  %1272 = vmatprep.subr.bf16.mxu0 %v141
  %1273 = vmatpush1.bf16.msra.mxu0 %v140
  %1274 = vmatprep.subr.bf16.mxu0 0
  %1275 = vmatpush1.bf16.msra.mxu0 0
  %1276 = vmatprep.subr.bf16.mxu0 0
  %1277 = vmatpush1.bf16.msra.mxu0 0
  %1278 = vmatprep.subr.bf16.mxu0 0
  %1279 = vmatpush1.bf16.msra.mxu0 0
  %1280 = vmatprep.subr.bf16.mxu0 0
  %1281 = vmatpush1.bf16.msra.mxu0 0
  %1282 = vmatprep.subr.bf16.mxu0 0
  %1283 = vmatpush1.bf16.msra.mxu0 0
  %1284 = vmatprep.subr.bf16.mxu0 0
  %1285 = vmatpush1.bf16.msra.mxu0 0
  %1286 = vmatprep.subr.bf16.mxu0 0
  %1287 = vmatpush1.bf16.msra.mxu0 0
  %1288 = vmatprep.subr.bf16.mxu0 0
  %1289 = vmatpush1.bf16.msra.mxu0 0
  %1290 = vmatprep.subr.bf16.mxu0 0
  %1291 = vmatpush1.bf16.msra.mxu0 0
  %1292 = vmatprep.subr.bf16.mxu0 0
  %1293 = vmatpush1.bf16.msra.mxu0 0
  %1294 = vmatprep.subr.bf16.mxu0 0
  %1295 = vmatpush1.bf16.msra.mxu0 0
  %1296 = vmatprep.subr.bf16.mxu0 0
  %1297 = vmatpush1.bf16.msra.mxu0 0
  %1298 = vmatprep.mubr.bf16.mxu0 0
  %1299 = vmatmul.mubr.bf16.gmra.mrb[0].mxu0 %v1264
  %v1300 = vpop.f32.mrb[0].mxu0
  %v1301 = vadd.f32 0.0, %v1300
  %v1302 = vpop.f32.mrb[0].mxu0
  %v1303 = vadd.f32 0.0, %v1302
  %v1304 = vpop.f32.mrb[0].mxu0
  %v1305 = vpop.f32.mrb[0].mxu0
  %1306 = vdwg.mxu0
  %v1309 = vrot.slane %v1301, 2
  %v1310 = vrot.slane %v1303, 2
  %v1313 = vadd.f32 %v95, %v1309
  %v1314 = vadd.f32 %v97, %v1310
  %v1315 = vxor.u32 %v1313, 2147483648
  %v1316 = vxor.u32 %v1314, 2147483648
  %v1317 = vmul.f32 %v1315, 1.442695
  %v1318 = vpow.pop %v1317
  %v1319 = vmul.f32 %v1316, 1.442695
  %v1320 = vpow.pop %v1319
  %v1321 = vadd.f32 %v1318, 1.0
  %v1322 = vadd.f32 %v1320, 1.0
  %v1323 = vrcp.pop %v1321
  %v1324 = vmul.f32 1.0, %v1323
  %v1325 = vrcp.pop %v1322
  %v1326 = vmul.f32 1.0, %v1325
  %v1327 = vtanh.pop %v1314
  %v1329 = vrot.slane %v1168, 7
  %v1331 = vmul.f32 %v1324, %v1329
  %1333 = vrot.lane.b32.xlu0 %v1327, 64
  %v1334 = vpop.permute.xlu0 %1333
  %v1336 = vmul.f32 %v1324, %v1334
  %1338 = vrot.lane.b32.xlu0 %v1336, 64
  %v1339 = vpop.permute.xlu0 %1338
  %v1341 = vadd.f32 %v1331, %v1339
  %v1342 = vtanh.pop %v1341
  %1344 = vrot.lane.b32.xlu0 %v1342, 64
  %v1345 = vpop.permute.xlu0 %1344
  %v1347 = vmul.f32 %v1326, %v1345
  %v1349 = vrot.slane %v1257, 2
  %1350 = vrot.lane.b32.xlu0 %v1349, 64
  %v1351 = vpop.permute.xlu0 %1350
  %v1353 = vsel %vm150, %v1347, %v1351
  %v1354 = vpack.c.bf16 %v1353, %v1353
  %v1356 = vrot.slane %v1354, 3
  %1358 = vmatprep.subr.bf16.mxu0 %v294
  %1359 = vmatpush1.bf16.msra.mxu0 %v293
  %1360 = vmatprep.subr.bf16.mxu0 %v296
  %1361 = vmatpush1.bf16.msra.mxu0 %v295
  %1362 = vmatprep.subr.bf16.mxu0 %v298
  %1363 = vmatpush1.bf16.msra.mxu0 %v297
  %1364 = vmatprep.subr.bf16.mxu0 %v300
  %1365 = vmatpush1.bf16.msra.mxu0 %v299
  %1366 = vmatprep.subr.bf16.mxu0 %v302
  %1367 = vmatpush1.bf16.msra.mxu0 %v301
  %1368 = vmatprep.subr.bf16.mxu0 %v304
  %1369 = vmatpush1.bf16.msra.mxu0 %v303
  %1370 = vmatprep.subr.bf16.mxu0 %v306
  %1371 = vmatpush1.bf16.msra.mxu0 %v305
  %1372 = vmatprep.subr.bf16.mxu0 %v308
  %1373 = vmatpush1.bf16.msra.mxu0 %v307
  %1374 = vmatprep.subr.bf16.mxu0 0
  %1375 = vmatpush1.bf16.msra.mxu0 0
  %1376 = vmatprep.subr.bf16.mxu0 0
  %1377 = vmatpush1.bf16.msra.mxu0 0
  %1378 = vmatprep.subr.bf16.mxu0 0
  %1379 = vmatpush1.bf16.msra.mxu0 0
  %1380 = vmatprep.subr.bf16.mxu0 0
  %1381 = vmatpush1.bf16.msra.mxu0 0
  %1382 = vmatprep.subr.bf16.mxu0 0
  %1383 = vmatpush1.bf16.msra.mxu0 0
  %1384 = vmatprep.subr.bf16.mxu0 0
  %1385 = vmatpush1.bf16.msra.mxu0 0
  %1386 = vmatprep.subr.bf16.mxu0 0
  %1387 = vmatpush1.bf16.msra.mxu0 0
  %1388 = vmatprep.subr.bf16.mxu0 0
  %1389 = vmatpush1.bf16.msra.mxu0 0
  %1390 = vmatprep.mubr.bf16.mxu0 0
  %1391 = vmatmul.mubr.bf16.gmra.mrb[0].mxu0 %v1356
  %v1392 = vpop.f32.mrb[0].mxu0
  %v1393 = vadd.f32 %v329, %v1392
  %v1394 = vpop.f32.mrb[0].mxu0
  %v1395 = vadd.f32 %v333, %v1394
  %v1396 = vpop.f32.mrb[0].mxu0
  %v1397 = vpop.f32.mrb[0].mxu0
  %1398 = vdwg.mxu0
  %v1399 = vxor.u32 %v1393, 2147483648
  %v1400 = vxor.u32 %v1395, 2147483648
  %v1401 = vmul.f32 %v1399, 1.442695
  %v1402 = vpow.pop %v1401
  %v1403 = vmul.f32 %v1400, 1.442695
  %v1404 = vpow.pop %v1403
  %v1405 = vadd.f32 %v1402, 1.0
  %v1406 = vadd.f32 %v1404, 1.0
  %v1407 = vrcp.pop %v1405
  %v1408 = vmul.f32 1.0, %v1407
  %v1409 = vrcp.pop %v1406
  %v1410 = vmul.f32 1.0, %v1409
  %v1411 = vtanh.pop %v1395
  %v1412 = vmul.f32 %v1408, %v1251
  %1414 = vrot.lane.b32.xlu0 %v1411, 64
  %v1415 = vpop.permute.xlu0 %1414
  %v1417 = vmul.f32 %v1408, %v1415
  %1419 = vrot.lane.b32.xlu0 %v1417, 64
  %v1420 = vpop.permute.xlu0 %1419
  %v1422 = vadd.f32 %v1412, %v1420
  %v1423 = vtanh.pop %v1422
  %1425 = vrot.lane.b32.xlu0 %v1423, 64
  %v1426 = vpop.permute.xlu0 %1425
  %v1428 = vmul.f32 %v1410, %v1426
  %v1429 = vpack.c.bf16 %v1347, %v1347
  %v1431 = vrot.slane %v1429, 3
  %v1433 = vsel %vm150, %v1431, 0
  %1435 = vmatprep.subr.bf16.mxu0 %v135
  %1436 = vmatpush1.bf16.msra.mxu0 %v134
  %1437 = vmatprep.subr.bf16.mxu0 %v137
  %1438 = vmatpush1.bf16.msra.mxu0 %v136
  %1439 = vmatprep.subr.bf16.mxu0 %v139
  %1440 = vmatpush1.bf16.msra.mxu0 %v138
  %1441 = vmatprep.subr.bf16.mxu0 %v141
  %1442 = vmatpush1.bf16.msra.mxu0 %v140
  %1443 = vmatprep.subr.bf16.mxu0 0
  %1444 = vmatpush1.bf16.msra.mxu0 0
  %1445 = vmatprep.subr.bf16.mxu0 0
  %1446 = vmatpush1.bf16.msra.mxu0 0
  %1447 = vmatprep.subr.bf16.mxu0 0
  %1448 = vmatpush1.bf16.msra.mxu0 0
  %1449 = vmatprep.subr.bf16.mxu0 0
  %1450 = vmatpush1.bf16.msra.mxu0 0
  %1451 = vmatprep.subr.bf16.mxu0 0
  %1452 = vmatpush1.bf16.msra.mxu0 0
  %1453 = vmatprep.subr.bf16.mxu0 0
  %1454 = vmatpush1.bf16.msra.mxu0 0
  %1455 = vmatprep.subr.bf16.mxu0 0
  %1456 = vmatpush1.bf16.msra.mxu0 0
  %1457 = vmatprep.subr.bf16.mxu0 0
  %1458 = vmatpush1.bf16.msra.mxu0 0
  %1459 = vmatprep.subr.bf16.mxu0 0
  %1460 = vmatpush1.bf16.msra.mxu0 0
  %1461 = vmatprep.subr.bf16.mxu0 0
  %1462 = vmatpush1.bf16.msra.mxu0 0
  %1463 = vmatprep.subr.bf16.mxu0 0
  %1464 = vmatpush1.bf16.msra.mxu0 0
  %1465 = vmatprep.subr.bf16.mxu0 0
  %1466 = vmatpush1.bf16.msra.mxu0 0
  %1467 = vmatprep.mubr.bf16.mxu0 0
  %1468 = vmatmul.mubr.bf16.gmra.mrb[0].mxu0 %v1433
  %v1469 = vpop.f32.mrb[0].mxu0
  %v1470 = vadd.f32 0.0, %v1469
  %v1471 = vpop.f32.mrb[0].mxu0
  %v1472 = vadd.f32 0.0, %v1471
  %v1473 = vpop.f32.mrb[0].mxu0
  %v1474 = vpop.f32.mrb[0].mxu0
  %1475 = vdwg.mxu0
  %v1478 = vrot.slane %v1470, 1
  %v1479 = vrot.slane %v1472, 1
  %v1482 = vadd.f32 %v95, %v1478
  %v1483 = vadd.f32 %v97, %v1479
  %v1484 = vxor.u32 %v1482, 2147483648
  %v1485 = vxor.u32 %v1483, 2147483648
  %v1486 = vmul.f32 %v1484, 1.442695
  %v1487 = vpow.pop %v1486
  %v1488 = vmul.f32 %v1485, 1.442695
  %v1489 = vpow.pop %v1488
  %v1490 = vadd.f32 %v1487, 1.0
  %v1491 = vadd.f32 %v1489, 1.0
  %v1492 = vrcp.pop %v1490
  %v1493 = vmul.f32 1.0, %v1492
  %v1494 = vrcp.pop %v1491
  %v1495 = vmul.f32 1.0, %v1494
  %v1496 = vtanh.pop %v1483
  %v1498 = vrot.slane %v1341, 7
  %v1500 = vmul.f32 %v1493, %v1498
  %1502 = vrot.lane.b32.xlu0 %v1496, 64
  %v1503 = vpop.permute.xlu0 %1502
  %v1505 = vmul.f32 %v1493, %v1503
  %1507 = vrot.lane.b32.xlu0 %v1505, 64
  %v1508 = vpop.permute.xlu0 %1507
  %v1510 = vadd.f32 %v1500, %v1508
  %v1511 = vtanh.pop %v1510
  %1513 = vrot.lane.b32.xlu0 %v1511, 64
  %v1514 = vpop.permute.xlu0 %1513
  %v1516 = vmul.f32 %v1495, %v1514
  %v1518 = vrot.slane %v1428, 1
  %1519 = vrot.lane.b32.xlu0 %v1518, 64
  %v1520 = vpop.permute.xlu0 %1519
  %v1522 = vsel %vm150, %v1516, %v1520
  %v1523 = vpack.c.bf16 %v1522, %v1522
  %v1525 = vshrl.u32 %v1523, 16
  %v1527 = vrot.slane %v1525, 3
  %1529 = vmatprep.subr.bf16.mxu0 %v294
  %1530 = vmatpush1.bf16.msra.mxu0 %v293
  %1531 = vmatprep.subr.bf16.mxu0 %v296
  %1532 = vmatpush1.bf16.msra.mxu0 %v295
  %1533 = vmatprep.subr.bf16.mxu0 %v298
  %1534 = vmatpush1.bf16.msra.mxu0 %v297
  %1535 = vmatprep.subr.bf16.mxu0 %v300
  %1536 = vmatpush1.bf16.msra.mxu0 %v299
  %1537 = vmatprep.subr.bf16.mxu0 %v302
  %1538 = vmatpush1.bf16.msra.mxu0 %v301
  %1539 = vmatprep.subr.bf16.mxu0 %v304
  %1540 = vmatpush1.bf16.msra.mxu0 %v303
  %1541 = vmatprep.subr.bf16.mxu0 %v306
  %1542 = vmatpush1.bf16.msra.mxu0 %v305
  %1543 = vmatprep.subr.bf16.mxu0 %v308
  %1544 = vmatpush1.bf16.msra.mxu0 %v307
  %1545 = vmatprep.subr.bf16.mxu0 0
  %1546 = vmatpush1.bf16.msra.mxu0 0
  %1547 = vmatprep.subr.bf16.mxu0 0
  %1548 = vmatpush1.bf16.msra.mxu0 0
  %1549 = vmatprep.subr.bf16.mxu0 0
  %1550 = vmatpush1.bf16.msra.mxu0 0
  %1551 = vmatprep.subr.bf16.mxu0 0
  %1552 = vmatpush1.bf16.msra.mxu0 0
  %1553 = vmatprep.subr.bf16.mxu0 0
  %1554 = vmatpush1.bf16.msra.mxu0 0
  %1555 = vmatprep.subr.bf16.mxu0 0
  %1556 = vmatpush1.bf16.msra.mxu0 0
  %1557 = vmatprep.subr.bf16.mxu0 0
  %1558 = vmatpush1.bf16.msra.mxu0 0
  %1559 = vmatprep.subr.bf16.mxu0 0
  %1560 = vmatpush1.bf16.msra.mxu0 0
  %1561 = vmatprep.mubr.bf16.mxu0 0
  %1562 = vmatmul.mubr.bf16.gmra.mrb[0].mxu0 %v1527
  %v1563 = vpop.f32.mrb[0].mxu0
  %v1564 = vadd.f32 %v329, %v1563
  %v1565 = vpop.f32.mrb[0].mxu0
  %v1566 = vadd.f32 %v333, %v1565
  %v1567 = vpop.f32.mrb[0].mxu0
  %v1568 = vpop.f32.mrb[0].mxu0
  %1569 = vdwg.mxu0
  %v1570 = vxor.u32 %v1564, 2147483648
  %v1571 = vxor.u32 %v1566, 2147483648
  %v1572 = vmul.f32 %v1570, 1.442695
  %v1573 = vpow.pop %v1572
  %v1574 = vmul.f32 %v1571, 1.442695
  %v1575 = vpow.pop %v1574
  %v1576 = vadd.f32 %v1573, 1.0
  %v1577 = vadd.f32 %v1575, 1.0
  %v1578 = vrcp.pop %v1576
  %v1579 = vmul.f32 1.0, %v1578
  %v1580 = vrcp.pop %v1577
  %v1581 = vmul.f32 1.0, %v1580
  %v1582 = vtanh.pop %v1566
  %v1583 = vmul.f32 %v1579, %v1422
  %1585 = vrot.lane.b32.xlu0 %v1582, 64
  %v1586 = vpop.permute.xlu0 %1585
  %v1588 = vmul.f32 %v1579, %v1586
  %1590 = vrot.lane.b32.xlu0 %v1588, 64
  %v1591 = vpop.permute.xlu0 %1590
  %v1593 = vadd.f32 %v1583, %v1591
  %v1594 = vtanh.pop %v1593
  %1596 = vrot.lane.b32.xlu0 %v1594, 64
  %v1597 = vpop.permute.xlu0 %1596
  %v1599 = vmul.f32 %v1581, %v1597
  %v1600 = vpack.c.bf16 %v1599, %v1599
  %v1601 = vld [vmem:[%s6] sm:$0xf]
  %v1602 = vld [vmem:[%s6 + $0x4] sm:$0xf]
  %v1603 = vld [vmem:[%s6 + $0x8] sm:$0xf]
  %v1604 = vld [vmem:[%s6 + $0xc] sm:$0xf]
  %v1605 = vld [vmem:[%s6 + $0x10] sm:$0xf]
  %v1606 = vld [vmem:[%s6 + $0x14] sm:$0xf]
  %v1607 = vld [vmem:[%s6 + $0x18] sm:$0xf]
  %v1608 = vld [vmem:[%s6 + $0x1c] sm:$0xf]
  %v1609 = vld [vmem:[%s7] sm:$0x1]
  %v1618 = vunpack.c.l.b16 %v1601
  %v1619 = vunpack.c.l.b16 %v1602
  %v1620 = vunpack.c.l.b16 %v1603
  %v1621 = vunpack.c.l.b16 %v1604
  %v1622 = vunpack.c.l.b16 %v1605
  %v1623 = vunpack.c.l.b16 %v1606
  %v1624 = vunpack.c.l.b16 %v1607
  %v1625 = vunpack.c.l.b16 %v1608
  %v1626 = vpack.c.b16 %v1619, %v1618
  %v1627 = vpack.c.b16 %v1621, %v1620
  %v1628 = vpack.c.b16 %v1623, %v1622
  %v1629 = vpack.c.b16 %v1625, %v1624
  %v1635 = vsel %vm150, %v1600, 0
  %1637 = vmatprep.subr.bf16.mxu0 0
  %1638 = vmatpush1.bf16.msra.mxu0 %v1626
  %1639 = vmatprep.subr.bf16.mxu0 0
  %1640 = vmatpush1.bf16.msra.mxu0 %v1627
  %1641 = vmatprep.subr.bf16.mxu0 0
  %1642 = vmatpush1.bf16.msra.mxu0 %v1628
  %1643 = vmatprep.subr.bf16.mxu0 0
  %1644 = vmatpush1.bf16.msra.mxu0 %v1629
  %1645 = vmatprep.subr.bf16.mxu0 0
  %1646 = vmatpush1.bf16.msra.mxu0 0
  %1647 = vmatprep.subr.bf16.mxu0 0
  %1648 = vmatpush1.bf16.msra.mxu0 0
  %1649 = vmatprep.subr.bf16.mxu0 0
  %1650 = vmatpush1.bf16.msra.mxu0 0
  %1651 = vmatprep.subr.bf16.mxu0 0
  %1652 = vmatpush1.bf16.msra.mxu0 0
  %1653 = vmatprep.subr.bf16.mxu0 0
  %1654 = vmatpush1.bf16.msra.mxu0 0
  %1655 = vmatprep.subr.bf16.mxu0 0
  %1656 = vmatpush1.bf16.msra.mxu0 0
  %1657 = vmatprep.subr.bf16.mxu0 0
  %1658 = vmatpush1.bf16.msra.mxu0 0
  %1659 = vmatprep.subr.bf16.mxu0 0
  %1660 = vmatpush1.bf16.msra.mxu0 0
  %1661 = vmatprep.subr.bf16.mxu0 0
  %1662 = vmatpush1.bf16.msra.mxu0 0
  %1663 = vmatprep.subr.bf16.mxu0 0
  %1664 = vmatpush1.bf16.msra.mxu0 0
  %1665 = vmatprep.subr.bf16.mxu0 0
  %1666 = vmatpush1.bf16.msra.mxu0 0
  %1667 = vmatprep.subr.bf16.mxu0 0
  %1668 = vmatpush1.bf16.msra.mxu0 0
  %1669 = vmatprep.mubr.bf16.mxu0 0
  %1670 = vmatmul.mubr.bf16.gmra.mrb[0].mxu0 %v1635
  %v1671 = vpop.f32.mrb[0].mxu0
  %v1672 = vadd.f32 %v1609, %v1671
  %v1673 = vpop.f32.mrb[0].mxu0
  %v1674 = vpop.f32.mrb[0].mxu0
  %v1675 = vpop.f32.mrb[0].mxu0
  %1676 = vdwg.mxu0
  %1677 = vst [vmem:[%s8] sm:$0x1] %v1672
  // Predicated region
  $region34: #{forward.1} parent=0 // pred_check
    _
  $region35: #{forward.1} parent=0 // pred_check_branch
    %1679 = sbr.rel (0) target = $region37
  $region36: #{forward.1} parent=0 // pred_region
    _
  $region37: #{forward.1} parent=0 // pred_fallthru
    _
  // Predicated region
  $region38: #{forward.1} parent=0 // pred_check
    _
  $region39: #{forward.1} parent=0 // pred_check_branch
    %1681 = sbr.rel (0) target = $region41
  $region40: #{forward.1} parent=0 // pred_region
    _
  $region41: #{forward.1} parent=0 // pred_fallthru
    _

</llo_original>
